<compile_context>
chip_gen: v7x
topology: tpu7x:2x2x1
jax: 0.10.0
libtpu: 0.0.40
codegen_flags: <defaults>
</compile_context>

<pallas_src>
import jax
import jax.numpy as jnp
from jax.experimental import pallas as pl
from jax.experimental.pallas import tpu as pltpu

H = 768            # BERT hidden size (fixed by nn.Linear(768, num_labels))
NUM_LABELS = 2     # args.num_labels
DR_RATE = 0.1      # args.dr_rate
LANE = 128         # lane width / padded classifier width


def _pick_tile(dim, pref, align):
    """Largest tile <= pref that divides dim and is a multiple of `align`.
    Falls back to the full dim (always legal for a BlockSpec)."""
    if dim <= pref:
        return dim
    t = (pref // align) * align
    while t >= align:
        if dim % t == 0:
            return t
        t -= align
    return dim


def _pick_batch_tile(B, pref=128):
    # v7x has two TensorCores: prefer >= 2 steps on the parallel batch axis
    # when the batch is large enough; align=8 keeps 2-D (TB, *) blocks legal.
    if B >= 16:
        pref = min(pref, B // 2)
    return _pick_tile(B, pref, 8)


def _pick_seq_tile(S, pref=32):
    # bf16 sublane packing prefers TS % 16 == 0; fall back to 8 before full-S.
    t = _pick_tile(S, pref, 16)
    if t == S and S > pref:
        t = _pick_tile(S, pref, 8)
    return t


def _vmem_limit_bytes(TB, TS, L_PAD):
    """Estimate the kernel's VMEM footprint (double-buffered operands +
    scratch) and return a safe scoped-VMEM limit for all TPU generations."""
    def lpad(n):
        return ((n + LANE - 1) // LANE) * LANE
    hid = 2 * TB * max(TS, 16) * H * 2          # bf16 hidden stream
    msk = 2 * TB * max(TS, 8) * lpad(1) * 4     # f32 mask (lane-padded)
    wp = 2 * H * H * 2                          # bf16 pooler weight
    wc = 2 * H * L_PAD * 2                      # bf16 classifier weight
    bias = 2 * (8 * H * 4 + 8 * L_PAD * 4)      # f32 biases (sublane-padded)
    drop = 2 * TB * H * 4                       # f32 dropout scale
    icnt = 2 * max(TB, 8) * lpad(1) * 4         # f32 inverse count
    out = 2 * TB * L_PAD * 4                    # f32 padded logits
    acc = TB * H * 4                            # f32 accumulator scratch
    total = hid + msk + wp + wc + bias + drop + icnt + out + acc
    # Generous headroom for compiler-internal scratch; stay well under v7x's
    # 64 MiB physical VMEM.
    return min(max(int(1.25 * total) + (6 << 20), 20 << 20), 48 << 20)


def detector_head_kernel(hid_ref, mask_ref, invcnt_ref, wp_ref, bp_ref,
                         wc_ref, bc_ref, drop_ref, out_ref, sum_acc):
    # hid_ref   : (TB, TS, H) bf16 — streamed encoder hidden-state tile
    # mask_ref  : (TB, TS, 1) f32  — attention-mask tile (0/1)
    # invcnt_ref: (TB, 1) f32      — precomputed 1 / max(mask count, 1)
    # wp_ref    : (H, H) bf16      — pooler dense weight (stand-in for bert pooler)
    # bp_ref    : (1, H) f32       — pooler bias
    # wc_ref    : (H, 128) bf16    — classifier Linear(768, num_labels), lane-padded
    # bc_ref    : (1, 128) f32     — classifier bias, lane-padded
    # drop_ref  : (TB, H) f32      — dropout keep/scale (ones in eval mode)
    # out_ref   : (TB, 128) f32    — lane-padded logits
    # sum_acc   : (TB, H) f32 VMEM scratch (masked-sum accumulator)
    si = pl.program_id(1)

    @pl.when(si == 0)
    def _init():
        sum_acc[...] = jnp.zeros_like(sum_acc)

    # Masked sum over the sequence tile on the VPU (f32 accumulate); hides
    # fully under the hidden-state DMA — no degenerate M=1 MXU einsum.
    hid = hid_ref[...].astype(jnp.float32)            # (TB, TS, H)
    sum_acc[...] += jnp.sum(hid * mask_ref[...], axis=1)

    @pl.when(si == pl.num_programs(1) - 1)
    def _finalize():
        # masked mean pooling (TB, H) f32
        cls_h = sum_acc[...] * invcnt_ref[...]

        # "pooler": dense(768, 768) + tanh, bf16 MXU matmul, f32 accumulation
        pooled = jnp.tanh(
            jnp.dot(cls_h.astype(jnp.bfloat16), wp_ref[...],
                    preferred_element_type=jnp.float32)
            + bp_ref[...]
        )

        # nn.Dropout(p=dr_rate): precomputed keep/(1-p) scale (ones in eval)
        pooled = pooled * drop_ref[...]

        # classifier: Linear(768, num_labels), lane-padded to 128 columns
        out_ref[...] = (
            jnp.dot(pooled.astype(jnp.bfloat16), wc_ref[...],
                    preferred_element_type=jnp.float32)
            + bc_ref[...]
        )


def malicious_comment_detector_head(hidden, attention_mask, w_pool, b_pool,
                                    w_cls, b_cls, *, dr_rate=DR_RATE,
                                    training=False, rng_key=None):
    B, S, Hh = hidden.shape
    assert Hh == H
    L = w_cls.shape[1]
    L_PAD = max(LANE, ((L + LANE - 1) // LANE) * LANE)

    # Lane-dense padding of the classifier weights / bias; weights in bf16.
    wc_p = jnp.zeros((H, L_PAD), jnp.bfloat16).at[:, :L].set(
        w_cls.astype(jnp.bfloat16))
    bc_p = jnp.zeros((1, L_PAD), jnp.float32).at[:, :L].set(
        b_cls.reshape(1, L).astype(jnp.float32))
    wp = w_pool.astype(jnp.bfloat16)
    bp = b_pool.reshape(1, H).astype(jnp.float32)

    # Dropout realized as a precomputed per-(row, feature) scale.
    if training and dr_rate:
        if rng_key is None:
            rng_key = jax.random.PRNGKey(0)
        keep = jax.random.bernoulli(rng_key, 1.0 - dr_rate, (B, H))
        drop_scale = keep.astype(jnp.float32) / (1.0 - dr_rate)
    else:
        drop_scale = jnp.ones((B, H), jnp.float32)

    hid_bf16 = hidden.astype(jnp.bfloat16)                    # halve HBM stream
    mask3 = attention_mask.astype(jnp.float32)[:, :, None]    # (B, S, 1)
    inv_cnt = 1.0 / jnp.maximum(
        attention_mask.astype(jnp.float32).sum(axis=1, keepdims=True), 1.0)

    # Tile sizes: batch tile up to 128 (split so v7x's 2 TCs both get work),
    # seq tile up to 32 (bf16-pack aligned, ~6 MiB/buffer hidden tile).
    TB = _pick_batch_tile(B)
    TS = _pick_seq_tile(S, 32)
    grid = (B // TB, S // TS)

    vmem_limit = _vmem_limit_bytes(TB, TS, L_PAD)

    out_padded = pl.pallas_call(
        detector_head_kernel,
        out_shape=jax.ShapeDtypeStruct((B, L_PAD), jnp.float32),
        grid=grid,
        in_specs=[
            pl.BlockSpec((TB, TS, H), lambda bi, si: (bi, si, 0)),  # hidden
            pl.BlockSpec((TB, TS, 1), lambda bi, si: (bi, si, 0)),  # mask
            pl.BlockSpec((TB, 1),     lambda bi, si: (bi, 0)),      # 1/count
            pl.BlockSpec((H, H),      lambda bi, si: (0, 0)),       # w_pool (bf16)
            pl.BlockSpec((1, H),      lambda bi, si: (0, 0)),       # b_pool
            pl.BlockSpec((H, L_PAD),  lambda bi, si: (0, 0)),       # w_cls (bf16, padded)
            pl.BlockSpec((1, L_PAD),  lambda bi, si: (0, 0)),       # b_cls (padded)
            pl.BlockSpec((TB, H),     lambda bi, si: (bi, 0)),      # dropout scale
        ],
        out_specs=pl.BlockSpec((TB, L_PAD), lambda bi, si: (bi, 0)),
        scratch_shapes=[
            pltpu.VMEM((TB, H), jnp.float32),   # masked-sum accumulator
        ],
        compiler_params=pltpu.CompilerParams(
            dimension_semantics=("parallel", "arbitrary"),
            vmem_limit_bytes=vmem_limit),
    )(hid_bf16, mask3, inv_cnt, wp, bp, wc_p, bc_p, drop_scale)

    return out_padded[:, :L]


if __name__ == "__main__":
    B, S, VOCAB = 2, 8, 128

    key = jax.random.PRNGKey(0)
    k_ids, k_tok, k_typ, k_wp, k_wc = jax.random.split(key, 5)

    # forward() inputs
    token_ids = jax.random.randint(k_ids, (B, S), 0, VOCAB, dtype=jnp.int32)
    token_type_ids = jnp.zeros((B, S), dtype=jnp.int32)
    attention_mask = jnp.concatenate(
        [jnp.ones((B, S - 2), jnp.float32), jnp.zeros((B, 2), jnp.float32)],
        axis=1,
    )

    # deterministic synthetic parameters
    token_emb = 0.02 * jax.random.normal(k_tok, (VOCAB, H), jnp.float32)
    type_emb = 0.02 * jax.random.normal(k_typ, (2, H), jnp.float32)
    w_pool = 0.02 * jax.random.normal(k_wp, (H, H), jnp.float32)
    b_pool = jnp.zeros((1, H), jnp.float32)
    w_cls = 0.02 * jax.random.normal(k_wc, (H, NUM_LABELS), jnp.float32)
    b_cls = jnp.zeros((1, NUM_LABELS), jnp.float32)

    # plain-JAX glue: embedding lookup producing synthetic encoder hidden states
    # TODO(synk): full 12-layer BERT encoder not implemented.
    hidden = token_emb[token_ids] + type_emb[token_type_ids]  # (B, S, H)

    # eval mode (deterministic): dropout is identity, matching nn.Dropout.eval()
    logits = malicious_comment_detector_head(
        hidden, attention_mask, w_pool, b_pool, w_cls, b_cls,
        dr_rate=DR_RATE, training=False,
    )
    jax.block_until_ready(logits)
    assert logits.shape == (B, NUM_LABELS)

    # pure-JAX reference (eval mode) for a numerical sanity check
    m = attention_mask[:, :, None]
    cls_ref = (hidden * m).sum(1) / jnp.maximum(
        attention_mask.sum(1, keepdims=True), 1.0)
    pooled_ref = jnp.tanh(cls_ref @ w_pool + b_pool)
    logits_ref = pooled_ref @ w_cls + b_cls
    assert jnp.allclose(logits, logits_ref, atol=2e-2), "mismatch vs reference"

    print("KERNEL_OK")
</pallas_src>

<mosaic_0001>
module attributes {stable_mosaic.version = 11 : i64} {
  func.func @detector_head_kernel(%arg0: i32, %arg1: i32, %arg2: memref<2x8x768xbf16, #tpu.memory_space<vmem>>, %arg3: memref<2x8x1xf32, #tpu.memory_space<vmem>>, %arg4: memref<2x1xf32, #tpu.memory_space<vmem>>, %arg5: memref<768x768xbf16, #tpu.memory_space<vmem>>, %arg6: memref<1x768xf32, #tpu.memory_space<vmem>>, %arg7: memref<768x128xbf16, #tpu.memory_space<vmem>>, %arg8: memref<1x128xf32, #tpu.memory_space<vmem>>, %arg9: memref<2x768xf32, #tpu.memory_space<vmem>>, %arg10: memref<2x128xf32, #tpu.memory_space<vmem>>, %arg11: memref<2x768xf32, #tpu.memory_space<vmem>>) attributes {dimension_semantics = [#tpu.dimension_semantics<parallel>, #tpu.dimension_semantics<arbitrary>], iteration_bounds = array<i64: 1, 1>, scalar_prefetch = 0 : i64, scratch_operands = 1 : i64, tpu.core_type = #tpu.core_type<tc>, window_params = [{transform_indices = @transform_0, window_bounds = array<i64: 2, 8, 768>}, {transform_indices = @transform_1, window_bounds = array<i64: 2, 8, 1>}, {transform_indices = @transform_2, window_bounds = array<i64: 2, 1>}, {pipeline_mode = #tpu.pipeline_mode<synchronous>, transform_indices = @transform_3, window_bounds = array<i64: 768, 768>}, {pipeline_mode = #tpu.pipeline_mode<synchronous>, transform_indices = @transform_4, window_bounds = array<i64: 1, 768>}, {pipeline_mode = #tpu.pipeline_mode<synchronous>, transform_indices = @transform_5, window_bounds = array<i64: 768, 128>}, {pipeline_mode = #tpu.pipeline_mode<synchronous>, transform_indices = @transform_6, window_bounds = array<i64: 1, 128>}, {transform_indices = @transform_7, window_bounds = array<i64: 2, 768>}, {transform_indices = @transform_8, window_bounds = array<i64: 2, 128>}]} {
    %c0_i32 = arith.constant 0 : i32
    %0 = arith.cmpi eq, %arg1, %c0_i32 : i32
    %1 = arith.extui %0 : i1 to i32
    %c0_i32_0 = arith.constant 0 : i32
    %2 = arith.cmpi ne, %1, %c0_i32_0 : i32
    scf.if %2 {
      %cst_12 = arith.constant 0.000000e+00 : f32
      %15 = vector.broadcast %cst_12 : f32 to vector<2x768xf32>
      %c0_13 = arith.constant 0 : index
      %c0_14 = arith.constant 0 : index
      %16 = vector.load %arg11[%c0_13, %c0_14] : memref<2x768xf32, #tpu.memory_space<vmem>>, vector<2x768xf32>
      tpu.vector_store %arg11[%c0_13, %c0_14], %15 {strides = array<i32>} : memref<2x768xf32, #tpu.memory_space<vmem>>, vector<2x768xf32>,
    } else {
    }
    %c0 = arith.constant 0 : index
    %c0_1 = arith.constant 0 : index
    %c0_2 = arith.constant 0 : index
    %3 = vector.load %arg2[%c0, %c0_1, %c0_2] : memref<2x8x768xbf16, #tpu.memory_space<vmem>>, vector<2x8x768xbf16>
    %4 = arith.extf %3 : vector<2x8x768xbf16> to vector<2x8x768xf32>
    %c0_3 = arith.constant 0 : index
    %c0_4 = arith.constant 0 : index
    %5 = vector.load %arg11[%c0_3, %c0_4] : memref<2x768xf32, #tpu.memory_space<vmem>>, vector<2x768xf32>
    %c0_5 = arith.constant 0 : index
    %c0_6 = arith.constant 0 : index
    %c0_7 = arith.constant 0 : index
    %6 = vector.load %arg3[%c0_5, %c0_6, %c0_7] : memref<2x8x1xf32, #tpu.memory_space<vmem>>, vector<2x8x1xf32>
    %7 = vector.broadcast %6 : vector<2x8x1xf32> to vector<2x8x768xf32>
    %8 = arith.mulf %4, %7 : vector<2x8x768xf32>
    %cst = arith.constant dense<0.000000e+00> : vector<2x768xf32>
    %9 = vector.multi_reduction <add>, %8, %cst [1] : vector<2x8x768xf32> to vector<2x768xf32>
    %10 = arith.addf %5, %9 : vector<2x768xf32>
    %c0_8 = arith.constant 0 : index
    %c0_9 = arith.constant 0 : index
    %11 = vector.load %arg11[%c0_8, %c0_9] : memref<2x768xf32, #tpu.memory_space<vmem>>, vector<2x768xf32>
    tpu.vector_store %arg11[%c0_8, %c0_9], %10 {strides = array<i32>} : memref<2x768xf32, #tpu.memory_space<vmem>>, vector<2x768xf32>,
    %c0_i32_10 = arith.constant 0 : i32
    %12 = arith.cmpi eq, %arg1, %c0_i32_10 : i32
    %13 = arith.extui %12 : i1 to i32
    %c0_i32_11 = arith.constant 0 : i32
    %14 = arith.cmpi ne, %13, %c0_i32_11 : i32
    scf.if %14 {
      %c0_12 = arith.constant 0 : index
      %c0_13 = arith.constant 0 : index
      %15 = vector.load %arg11[%c0_12, %c0_13] : memref<2x768xf32, #tpu.memory_space<vmem>>, vector<2x768xf32>
      %c0_14 = arith.constant 0 : index
      %c0_15 = arith.constant 0 : index
      %16 = vector.load %arg4[%c0_14, %c0_15] : memref<2x1xf32, #tpu.memory_space<vmem>>, vector<2x1xf32>
      %17 = vector.broadcast %16 : vector<2x1xf32> to vector<2x768xf32>
      %18 = arith.mulf %15, %17 : vector<2x768xf32>
      %19 = arith.truncf %18 : vector<2x768xf32> to vector<2x768xbf16>
      %c0_16 = arith.constant 0 : index
      %c0_17 = arith.constant 0 : index
      %20 = vector.load %arg5[%c0_16, %c0_17] : memref<768x768xbf16, #tpu.memory_space<vmem>>, vector<768x768xbf16>
      %cst_18 = arith.constant dense<0.000000e+00> : vector<2x768xf32>
      %21 = tpu.matmul %19, %20, %cst_18 {dimension_numbers = #tpu.dot_dimension_numbers<[1], [0], [0], [1], [0, 0, 1, 1], [], []>} : vector<2x768xbf16>, vector<768x768xbf16>, vector<2x768xf32> -> vector<2x768xf32>
      %c0_19 = arith.constant 0 : index
      %c0_20 = arith.constant 0 : index
      %22 = vector.load %arg6[%c0_19, %c0_20] : memref<1x768xf32, #tpu.memory_space<vmem>>, vector<1x768xf32>
      %23 = vector.broadcast %22 : vector<1x768xf32> to vector<2x768xf32>
      %24 = arith.addf %21, %23 : vector<2x768xf32>
      %25 = math.tanh %24 : vector<2x768xf32>
      %c0_21 = arith.constant 0 : index
      %c0_22 = arith.constant 0 : index
      %26 = vector.load %arg9[%c0_21, %c0_22] : memref<2x768xf32, #tpu.memory_space<vmem>>, vector<2x768xf32>
      %27 = arith.mulf %25, %26 : vector<2x768xf32>
      %28 = arith.truncf %27 : vector<2x768xf32> to vector<2x768xbf16>
      %c0_23 = arith.constant 0 : index
      %c0_24 = arith.constant 0 : index
      %29 = vector.load %arg7[%c0_23, %c0_24] : memref<768x128xbf16, #tpu.memory_space<vmem>>, vector<768x128xbf16>
      %cst_25 = arith.constant dense<0.000000e+00> : vector<2x128xf32>
      %30 = tpu.matmul %28, %29, %cst_25 {dimension_numbers = #tpu.dot_dimension_numbers<[1], [0], [0], [1], [0, 0, 1, 1], [], []>} : vector<2x768xbf16>, vector<768x128xbf16>, vector<2x128xf32> -> vector<2x128xf32>
      %c0_26 = arith.constant 0 : index
      %c0_27 = arith.constant 0 : index
      %31 = vector.load %arg8[%c0_26, %c0_27] : memref<1x128xf32, #tpu.memory_space<vmem>>, vector<1x128xf32>
      %32 = vector.broadcast %31 : vector<1x128xf32> to vector<2x128xf32>
      %33 = arith.addf %30, %32 : vector<2x128xf32>
      %c0_28 = arith.constant 0 : index
      %c0_29 = arith.constant 0 : index
      %34 = vector.load %arg10[%c0_28, %c0_29] : memref<2x128xf32, #tpu.memory_space<vmem>>, vector<2x128xf32>
      tpu.vector_store %arg10[%c0_28, %c0_29], %33 {strides = array<i32>} : memref<2x128xf32, #tpu.memory_space<vmem>>, vector<2x128xf32>,
    } else {
    }
    return
  }
  func.func @transform_0(%arg0: i32, %arg1: i32) -> (i32, i32, i32) {
    %c0_i32 = arith.constant 0 : i32
    %c0_i32_0 = arith.constant 0 : i32
    return %arg0, %arg1, %c0_i32 : i32, i32, i32
  }
  func.func @transform_1(%arg0: i32, %arg1: i32) -> (i32, i32, i32) {
    %c0_i32 = arith.constant 0 : i32
    %c0_i32_0 = arith.constant 0 : i32
    return %arg0, %arg1, %c0_i32 : i32, i32, i32
  }
  func.func @transform_2(%arg0: i32, %arg1: i32) -> (i32, i32) {
    %c0_i32 = arith.constant 0 : i32
    %c0_i32_0 = arith.constant 0 : i32
    return %arg0, %c0_i32 : i32, i32
  }
  func.func @transform_3(%arg0: i32, %arg1: i32) -> (i32, i32) {
    %c0_i32 = arith.constant 0 : i32
    %c0_i32_0 = arith.constant 0 : i32
    %c0_i32_1 = arith.constant 0 : i32
    return %c0_i32, %c0_i32_0 : i32, i32
  }
  func.func @transform_4(%arg0: i32, %arg1: i32) -> (i32, i32) {
    %c0_i32 = arith.constant 0 : i32
    %c0_i32_0 = arith.constant 0 : i32
    %c0_i32_1 = arith.constant 0 : i32
    return %c0_i32, %c0_i32_0 : i32, i32
  }
  func.func @transform_5(%arg0: i32, %arg1: i32) -> (i32, i32) {
    %c0_i32 = arith.constant 0 : i32
    %c0_i32_0 = arith.constant 0 : i32
    %c0_i32_1 = arith.constant 0 : i32
    return %c0_i32, %c0_i32_0 : i32, i32
  }
  func.func @transform_6(%arg0: i32, %arg1: i32) -> (i32, i32) {
    %c0_i32 = arith.constant 0 : i32
    %c0_i32_0 = arith.constant 0 : i32
    %c0_i32_1 = arith.constant 0 : i32
    return %c0_i32, %c0_i32_0 : i32, i32
  }
  func.func @transform_7(%arg0: i32, %arg1: i32) -> (i32, i32) {
    %c0_i32 = arith.constant 0 : i32
    %c0_i32_0 = arith.constant 0 : i32
    return %arg0, %c0_i32 : i32, i32
  }
  func.func @transform_8(%arg0: i32, %arg1: i32) -> (i32, i32) {
    %c0_i32 = arith.constant 0 : i32
    %c0_i32_0 = arith.constant 0 : i32
    return %arg0, %c0_i32 : i32, i32
  }
}

</mosaic_0001>

<llo_original>
// kernel: tpu_custom_call.1
$region0: #{tpu_custom_call.1}
  #allocation0 [shape = 'u32[]', space=smem, size = 0x4, offset = 0x4, fixed_abs, tag = 'smem constant byte address 0x4 - core index']
  #allocation1 [shape = 'u32[144,128]{1,0:T(1,128)}', space=vmem, size = 0x12000, scoped, tag = 'internal scratch']
  #allocation2 [shape = 'f32[2,768]{1,0:T(2,128)}', space=vmem, size = 0x1800, scoped, tag = 'scratch operand']
  %s0 = inlined_call_operand.hbm [shape: bf16[2,8,768], index: 0, kind: input, shape index: {}]
  %s1 = inlined_call_operand.vmem [shape: f32[2,8,1], index: 1, kind: input, shape index: {}]
  %s2 = inlined_call_operand.vmem [shape: f32[2,1], index: 2, kind: input, shape index: {}]
  %s3 = inlined_call_operand.hbm [shape: bf16[768,768], index: 3, kind: input, shape index: {}]
  %s4 = inlined_call_operand.hbm [shape: f32[1,768], index: 4, kind: input, shape index: {}]
  %s5 = inlined_call_operand.hbm [shape: bf16[768,128], index: 5, kind: input, shape index: {}]
  %s6 = inlined_call_operand.hbm [shape: f32[1,128], index: 6, kind: input, shape index: {}]
  %s7 = inlined_call_operand.hbm [shape: f32[2,768], index: 7, kind: input, shape index: {}]
  %s8 = inlined_call_operand.hbm [shape: f32[2,128], index: 8, kind: output, shape index: {}]
  %s9 = sld [smem:[#allocation0]]
  $region74: #{tpu_custom_call.1} parent=0
    _
  %s11 = ssub.s32 1, %s9
  %s12 = scalar_select 0, %s11, %s9
  $region1: #{tpu_custom_call.1} parent=0
    #allocation3 [shape = 'u8[24576]{0}', space=vmem, size = 0x6000, scoped, tag = 'input window, operand 0, single buffered']
    #allocation4 [shape = 's32[1]{0}', space=sflag, size = 0x4, scoped, tag = 'scoped memory for tpu_custom_call.1']
    #allocation5 [shape = 's32[1]{0}', space=sflag, size = 0x4, scoped, tag = 'scoped memory for tpu_custom_call.1']
    #allocation6 [shape = 'u8[1179648]{0}', space=vmem, size = 0x120000, scoped, tag = 'input window, operand 3, single buffered']
    #allocation7 [shape = 's32[1]{0}', space=sflag, size = 0x4, scoped, tag = 'scoped memory for tpu_custom_call.1']
    #allocation8 [shape = 'u8[3072]{0}', space=vmem, size = 0xc00, scoped, tag = 'input window, operand 4, single buffered']
    #allocation9 [shape = 'u8[196608]{0}', space=vmem, size = 0x30000, scoped, tag = 'input window, operand 5, single buffered']
    #allocation10 [shape = 's32[1]{0}', space=sflag, size = 0x4, scoped, tag = 'scoped memory for tpu_custom_call.1']
    #allocation11 [shape = 'u8[512]{0}', space=vmem, size = 0x400, scoped, tag = 'input window, operand 6, single buffered']
    #allocation12 [shape = 'u8[6144]{0}', space=vmem, size = 0x1800, scoped, tag = 'input window, operand 7, single buffered']
    #allocation13 [shape = 's32[1]{0}', space=sflag, size = 0x4, scoped, tag = 'scoped memory for tpu_custom_call.1']
    #allocation14 [shape = 'u8[1024]{0}', space=vmem, size = 0x400, scoped, tag = 'output window, operand 0, single buffered']
    %13 = vsyncpa [#allocation4], 0
    %14 = vsyncpa [#allocation7], 0
    %15 = vsyncpa [#allocation10], 0
    %16 = vsyncpa [#allocation13], 0
    %17 = vsyncpa [#allocation5], 0
    // Predicated region
    $region2: #{tpu_custom_call.1} parent=1 // pred_check
      _
    $region3: #{tpu_custom_call.1} parent=1 // pred_check_branch
      %19 = sbr.rel (0) target = $region5
    $region4: #{tpu_custom_call.1} parent=1 // pred_region
      %s21 = ssub.s32 768, 768
      %22 = vsyncadd [#allocation4], %s21
      %s23 = sshll.u32 [#allocation3], 4
      %s24 = int_to_ptr.vmem [resolvable:$true] %s23
      %29 = dma.hbm_to_vmem [thread:$0]  %s0, 768, %s24, [#allocation4], 384, 384, 24
    $region5: #{tpu_custom_call.1} parent=1 // pred_fallthru
      _
    // Predicated region
    $region6: #{tpu_custom_call.1} parent=1 // pred_check
      _
    $region7: #{tpu_custom_call.1} parent=1 // pred_check_branch
      %31 = sbr.rel (0) target = $region9
    $region8: #{tpu_custom_call.1} parent=1 // pred_region
      _
    $region9: #{tpu_custom_call.1} parent=1 // pred_fallthru
      _
    // Predicated region
    $region10: #{tpu_custom_call.1} parent=1 // pred_check
      _
    $region11: #{tpu_custom_call.1} parent=1 // pred_check_branch
      %33 = sbr.rel (0) target = $region13
    $region12: #{tpu_custom_call.1} parent=1 // pred_region
      _
    $region13: #{tpu_custom_call.1} parent=1 // pred_fallthru
      _
    // Predicated region
    $region14: #{tpu_custom_call.1} parent=1 // pred_check
      _
    $region15: #{tpu_custom_call.1} parent=1 // pred_check_branch
      %35 = sbr.rel (0) target = $region17
    $region16: #{tpu_custom_call.1} parent=1 // pred_region
      %s37 = ssub.s32 36864, 36864
      %38 = vsyncadd [#allocation7], %s37
      %s39 = sshll.u32 [#allocation6], 4
      %s40 = int_to_ptr.vmem [resolvable:$true] %s39
      %45 = dma.hbm_to_vmem [thread:$0]  %s3, 36864, %s40, [#allocation7], 384, 384, 24
    $region17: #{tpu_custom_call.1} parent=1 // pred_fallthru
      _
    // Predicated region
    $region18: #{tpu_custom_call.1} parent=1 // pred_check
      _
    $region19: #{tpu_custom_call.1} parent=1 // pred_check_branch
      %47 = sbr.rel (0) target = $region21
    $region20: #{tpu_custom_call.1} parent=1 // pred_region
      %s49 = ssub.s32 96, 96
      %50 = vsyncadd [#allocation7], %s49
      %s52 = sshll.u32 [#allocation8], 4
      %s53 = int_to_ptr.vmem [resolvable:$true] %s52
      %55 = dma.hbm_to_vmem [thread:$0]  %s4, 96, %s53, [#allocation7]
    $region21: #{tpu_custom_call.1} parent=1 // pred_fallthru
      _
    // Predicated region
    $region22: #{tpu_custom_call.1} parent=1 // pred_check
      _
    $region23: #{tpu_custom_call.1} parent=1 // pred_check_branch
      %57 = sbr.rel (0) target = $region25
    $region24: #{tpu_custom_call.1} parent=1 // pred_region
      %s59 = ssub.s32 6144, 6144
      %60 = vsyncadd [#allocation10], %s59
      %s61 = sshll.u32 [#allocation9], 4
      %s62 = int_to_ptr.vmem [resolvable:$true] %s61
      %67 = dma.hbm_to_vmem [thread:$0]  %s5, 6144, %s62, [#allocation10], 64, 64, 4
    $region25: #{tpu_custom_call.1} parent=1 // pred_fallthru
      _
    // Predicated region
    $region26: #{tpu_custom_call.1} parent=1 // pred_check
      _
    $region27: #{tpu_custom_call.1} parent=1 // pred_check_branch
      %69 = sbr.rel (0) target = $region29
    $region28: #{tpu_custom_call.1} parent=1 // pred_region
      %s71 = ssub.s32 16, 16
      %72 = vsyncadd [#allocation10], %s71
      %s74 = sshll.u32 [#allocation11], 4
      %s75 = int_to_ptr.vmem [resolvable:$true] %s74
      %77 = dma.hbm_to_vmem [thread:$0]  %s6, 16, %s75, [#allocation10]
    $region29: #{tpu_custom_call.1} parent=1 // pred_fallthru
      _
    // Predicated region
    $region30: #{tpu_custom_call.1} parent=1 // pred_check
      _
    $region31: #{tpu_custom_call.1} parent=1 // pred_check_branch
      %79 = sbr.rel (0) target = $region33
    $region32: #{tpu_custom_call.1} parent=1 // pred_region
      %s81 = ssub.s32 192, 192
      %82 = vsyncadd [#allocation13], %s81
      %s84 = sshll.u32 [#allocation12], 4
      %s85 = int_to_ptr.vmem [resolvable:$true] %s84
      %87 = dma.hbm_to_vmem [thread:$0]  %s7, 192, %s85, [#allocation13]
    $region33: #{tpu_custom_call.1} parent=1 // pred_fallthru
      _
    // Predicated region
    $region34: #{tpu_custom_call.1} parent=1 // pred_check
      _
    $region35: #{tpu_custom_call.1} parent=1 // pred_check_branch
      %89 = sbr.rel (0) target = $region37
    $region36: #{tpu_custom_call.1} parent=1 // pred_region
      %90 = dma.done [#allocation4], 768
    $region37: #{tpu_custom_call.1} parent=1 // pred_fallthru
      _
    // Predicated region
    $region38: #{tpu_custom_call.1} parent=1 // pred_check
      _
    $region39: #{tpu_custom_call.1} parent=1 // pred_check_branch
      %92 = sbr.rel (0) target = $region41
    $region40: #{tpu_custom_call.1} parent=1 // pred_region
      %93 = dma.done [#allocation7], 36864
    $region41: #{tpu_custom_call.1} parent=1 // pred_fallthru
      _
    // Predicated region
    $region42: #{tpu_custom_call.1} parent=1 // pred_check
      _
    $region43: #{tpu_custom_call.1} parent=1 // pred_check_branch
      %95 = sbr.rel (0) target = $region45
    $region44: #{tpu_custom_call.1} parent=1 // pred_region
      %96 = dma.done [#allocation7], 96
    $region45: #{tpu_custom_call.1} parent=1 // pred_fallthru
      _
    // Predicated region
    $region46: #{tpu_custom_call.1} parent=1 // pred_check
      _
    $region47: #{tpu_custom_call.1} parent=1 // pred_check_branch
      %98 = sbr.rel (0) target = $region49
    $region48: #{tpu_custom_call.1} parent=1 // pred_region
      %99 = dma.done [#allocation10], 6144
    $region49: #{tpu_custom_call.1} parent=1 // pred_fallthru
      _
    // Predicated region
    $region50: #{tpu_custom_call.1} parent=1 // pred_check
      _
    $region51: #{tpu_custom_call.1} parent=1 // pred_check_branch
      %101 = sbr.rel (0) target = $region53
    $region52: #{tpu_custom_call.1} parent=1 // pred_region
      %102 = dma.done [#allocation10], 16
    $region53: #{tpu_custom_call.1} parent=1 // pred_fallthru
      _
    // Predicated region
    $region54: #{tpu_custom_call.1} parent=1 // pred_check
      _
    $region55: #{tpu_custom_call.1} parent=1 // pred_check_branch
      %104 = sbr.rel (0) target = $region57
    $region56: #{tpu_custom_call.1} parent=1 // pred_region
      %105 = dma.done [#allocation13], 192
    $region57: #{tpu_custom_call.1} parent=1 // pred_fallthru
      _
    %p107 = scmp.eq.s32.totalorder 0, 0
    // Predicated region
    $region58: #{tpu_custom_call.1} parent=1 // pred_check
      %p108 = pneg %p107
    $region59: #{tpu_custom_call.1} parent=1 // pred_check_branch
      %110 = sbr.rel (%p108) target = $region61
    $region60: #{tpu_custom_call.1} parent=1 // pred_region
      %111 = vst [vmem:[#allocation2] sm:$0xff] 0.0
      %112 = vst [vmem:[#allocation2 + $0x8] sm:$0xf] 0.0
    $region61: #{tpu_custom_call.1} parent=1 // pred_fallthru
      _
    %v113 = vld [vmem:[#allocation3] sm:$0xff]
    %v114 = vld [vmem:[#allocation3 + $0x8] sm:$0xff]
    %v115 = vld [vmem:[#allocation3 + $0x10] sm:$0xff]
    %v116 = vld [vmem:[#allocation3 + $0x18] sm:$0xff]
    %v117 = vld [vmem:[#allocation3 + $0x20] sm:$0xff]
    %v118 = vld [vmem:[#allocation3 + $0x28] sm:$0xff]
    %v119 = vunpack.c.l.bf16 %v113
    %v120 = vunpack.c.h.bf16 %v113
    %v121 = vunpack.c.l.bf16 %v114
    %v122 = vunpack.c.h.bf16 %v114
    %v123 = vunpack.c.l.bf16 %v115
    %v124 = vunpack.c.h.bf16 %v115
    %v125 = vunpack.c.l.bf16 %v116
    %v126 = vunpack.c.h.bf16 %v116
    %v127 = vunpack.c.l.bf16 %v117
    %v128 = vunpack.c.h.bf16 %v117
    %v129 = vunpack.c.l.bf16 %v118
    %v130 = vunpack.c.h.bf16 %v118
    %v131 = vld [vmem:[#allocation2] sm:$0xff]
    %v132 = vld [vmem:[#allocation2 + $0x8] sm:$0xf]
    %v133 = vld [vmem:[%s1] sm:$0xff]
    %v134 = vld [vmem:[%s1 + $0x8] sm:$0xff]
    %136 = vset.pattern.permute.xlu0 0
    %137 = vperm.xlu0 %136, %v133
    %v138 = vpop.permute.xlu0 %137
    %141 = vset.pattern.permute.xlu0 0
    %142 = vperm.xlu0 %141, %v134
    %v143 = vpop.permute.xlu0 %142
    %v145 = vmul.f32 %v119, %v138
    %v146 = vmul.f32 %v120, %v138
    %v147 = vmul.f32 %v121, %v138
    %v148 = vmul.f32 %v122, %v138
    %v149 = vmul.f32 %v123, %v138
    %v150 = vmul.f32 %v124, %v138
    %v151 = vmul.f32 %v125, %v143
    %v152 = vmul.f32 %v126, %v143
    %v153 = vmul.f32 %v127, %v143
    %v154 = vmul.f32 %v128, %v143
    %v155 = vmul.f32 %v129, %v143
    %v156 = vmul.f32 %v130, %v143
    %v157 = vrot.slane %v145, 4
    %v158 = vadd.f32 %v145, %v157
    %v159 = vrot.slane %v158, 2
    %v160 = vadd.f32 %v158, %v159
    %v161 = vrot.slane %v160, 1
    %v162 = vadd.f32 %v160, %v161
    %v163 = vrot.slane %v146, 4
    %v164 = vadd.f32 %v146, %v163
    %v165 = vrot.slane %v164, 2
    %v166 = vadd.f32 %v164, %v165
    %v167 = vrot.slane %v166, 1
    %v168 = vadd.f32 %v166, %v167
    %v169 = vrot.slane %v147, 4
    %v170 = vadd.f32 %v147, %v169
    %v171 = vrot.slane %v170, 2
    %v172 = vadd.f32 %v170, %v171
    %v173 = vrot.slane %v172, 1
    %v174 = vadd.f32 %v172, %v173
    %v175 = vrot.slane %v148, 4
    %v176 = vadd.f32 %v148, %v175
    %v177 = vrot.slane %v176, 2
    %v178 = vadd.f32 %v176, %v177
    %v179 = vrot.slane %v178, 1
    %v180 = vadd.f32 %v178, %v179
    %v181 = vrot.slane %v149, 4
    %v182 = vadd.f32 %v149, %v181
    %v183 = vrot.slane %v182, 2
    %v184 = vadd.f32 %v182, %v183
    %v185 = vrot.slane %v184, 1
    %v186 = vadd.f32 %v184, %v185
    %v187 = vrot.slane %v150, 4
    %v188 = vadd.f32 %v150, %v187
    %v189 = vrot.slane %v188, 2
    %v190 = vadd.f32 %v188, %v189
    %v191 = vrot.slane %v190, 1
    %v192 = vadd.f32 %v190, %v191
    %v193 = vrot.slane %v151, 4
    %v194 = vadd.f32 %v151, %v193
    %v195 = vrot.slane %v194, 2
    %v196 = vadd.f32 %v194, %v195
    %v197 = vrot.slane %v196, 1
    %v198 = vadd.f32 %v196, %v197
    %v199 = vrot.slane %v152, 4
    %v200 = vadd.f32 %v152, %v199
    %v201 = vrot.slane %v200, 2
    %v202 = vadd.f32 %v200, %v201
    %v203 = vrot.slane %v202, 1
    %v204 = vadd.f32 %v202, %v203
    %v205 = vrot.slane %v153, 4
    %v206 = vadd.f32 %v153, %v205
    %v207 = vrot.slane %v206, 2
    %v208 = vadd.f32 %v206, %v207
    %v209 = vrot.slane %v208, 1
    %v210 = vadd.f32 %v208, %v209
    %v211 = vrot.slane %v154, 4
    %v212 = vadd.f32 %v154, %v211
    %v213 = vrot.slane %v212, 2
    %v214 = vadd.f32 %v212, %v213
    %v215 = vrot.slane %v214, 1
    %v216 = vadd.f32 %v214, %v215
    %v217 = vrot.slane %v155, 4
    %v218 = vadd.f32 %v155, %v217
    %v219 = vrot.slane %v218, 2
    %v220 = vadd.f32 %v218, %v219
    %v221 = vrot.slane %v220, 1
    %v222 = vadd.f32 %v220, %v221
    %v223 = vrot.slane %v156, 4
    %v224 = vadd.f32 %v156, %v223
    %v225 = vrot.slane %v224, 2
    %v226 = vadd.f32 %v224, %v225
    %v227 = vrot.slane %v226, 1
    %v228 = vadd.f32 %v226, %v227
    %v241 = vcombine.low %v162, %v168
    %v242 = vcombine.low %v174, %v180
    %v244 = vunpack.c.l.s4 1983009808
    %v245 = vunpack.c.0.s8 %v244
    %v246 = vlaneseq
    %v247 = vshrl.u32 %v246, 7
    %v248 = vsub.s32 %v245, %v247
    %v249 = vrot.slane %v241, %v248
    %v251 = vunpack.c.l.s4 1983009808
    %v252 = vunpack.c.0.s8 %v251
    %v253 = vlaneseq
    %v254 = vshrl.u32 %v253, 7
    %v255 = vsub.s32 %v252, %v254
    %v256 = vrot.slane %v242, %v255
    %v257 = vcombine.low %v249, %v256
    %v258 = vcombine.low %v186, %v192
    %v260 = vunpack.c.l.s4 1983009808
    %v261 = vunpack.c.0.s8 %v260
    %v262 = vlaneseq
    %v263 = vshrl.u32 %v262, 7
    %v264 = vsub.s32 %v261, %v263
    %v265 = vrot.slane %v258, %v264
    %v266 = vcombine.low %v198, %v204
    %v267 = vcombine.low %v210, %v216
    %v269 = vunpack.c.l.s4 1983009808
    %v270 = vunpack.c.0.s8 %v269
    %v271 = vlaneseq
    %v272 = vshrl.u32 %v271, 7
    %v273 = vsub.s32 %v270, %v272
    %v274 = vrot.slane %v266, %v273
    %v276 = vunpack.c.l.s4 1983009808
    %v277 = vunpack.c.0.s8 %v276
    %v278 = vlaneseq
    %v279 = vshrl.u32 %v278, 7
    %v280 = vsub.s32 %v277, %v279
    %v281 = vrot.slane %v267, %v280
    %v282 = vcombine.low %v274, %v281
    %v283 = vcombine.low %v222, %v228
    %v285 = vunpack.c.l.s4 1983009808
    %v286 = vunpack.c.0.s8 %v285
    %v287 = vlaneseq
    %v288 = vshrl.u32 %v287, 7
    %v289 = vsub.s32 %v286, %v288
    %v290 = vrot.slane %v283, %v289
    %vm291 = vcmask 1044484
    %v292 = vsel %vm291, %v257, %v257
    %vm293 = vcmask 1046534
    %v294 = vsel %vm293, %v257, %v292
    %v295 = vrot.slane %v282, 7
    %vm296 = vcmask 1041409
    %v297 = vsel %vm296, %v295, %v294
    %vm298 = vcmask 1043459
    %v299 = vsel %vm298, %v295, %v297
    %vm300 = vcmask 1045509
    %v301 = vsel %vm300, %v295, %v299
    %vm302 = vcmask 1047559
    %v303 = vsel %vm302, %v295, %v301
    %v304 = vsel %vm291, %v265, %v265
    %v305 = vsel %vm293, %v265, %v304
    %v306 = vrot.slane %v290, 7
    %v307 = vsel %vm296, %v306, %v305
    %v308 = vsel %vm298, %v306, %v307
    %v309 = vsel %vm300, %v306, %v308
    %v310 = vsel %vm302, %v306, %v309
    %v313 = vadd.f32 %v131, %v303
    %v314 = vadd.f32 %v132, %v310
    %315 = vst [vmem:[#allocation2] sm:$0xff] %v313
    %316 = vst [vmem:[#allocation2 + $0x8] sm:$0xf] %v314
    // Predicated region
    $region62: #{tpu_custom_call.1} parent=1 // pred_check
      %p317 = pneg %p107
    $region63: #{tpu_custom_call.1} parent=1 // pred_check_branch
      %319 = sbr.rel (%p317) target = $region65
    $region64: #{tpu_custom_call.1} parent=1 // pred_region
      %v320 = vld [vmem:[#allocation2] sm:$0xff]
      %v321 = vld [vmem:[#allocation2 + $0x8] sm:$0xf]
      %v322 = vld [vmem:[%s2] sm:$0x3]
      %324 = vset.pattern.permute.xlu0 0
      %325 = vperm.xlu0 %324, %v322
      %v326 = vpop.permute.xlu0 %325
      %v328 = vunpack.c.l.s4 269488144
      %v329 = vunpack.c.0.s8 %v328
      %v330 = vlaneseq
      %v331 = vshrl.u32 %v330, 7
      %v332 = vsub.s32 %v329, %v331
      %v333 = vrot.slane %v326, %v332
      %v335 = vmul.f32 %v320, %v333
      %v336 = vmul.f32 %v321, %v333
      %v339 = vcombine.high %v335, %v335
      %v341 = vunpack.c.l.s4 1983009808
      %v342 = vunpack.c.0.s8 %v341
      %v343 = vlaneseq
      %v344 = vshrl.u32 %v343, 7
      %v345 = vsub.s32 %v342, %v344
      %v346 = vrot.slane %v335, %v345
      %v348 = vunpack.c.l.s4 1983009808
      %v349 = vunpack.c.0.s8 %v348
      %v350 = vlaneseq
      %v351 = vshrl.u32 %v350, 7
      %v352 = vsub.s32 %v349, %v351
      %v353 = vrot.slane %v339, %v352
      %v354 = vcombine.high %v346, %v346
      %v355 = vcombine.high %v353, %v353
      %v357 = vunpack.c.l.s4 1983009808
      %v358 = vunpack.c.0.s8 %v357
      %v359 = vlaneseq
      %v360 = vshrl.u32 %v359, 7
      %v361 = vsub.s32 %v358, %v360
      %v362 = vrot.slane %v336, %v361
      %v363 = vcombine.high %v362, %v362
      %v370 = vpack.c.bf16 %v346, %v346
      %v371 = vpack.c.bf16 %v354, %v354
      %v372 = vpack.c.bf16 %v353, %v353
      %v373 = vpack.c.bf16 %v355, %v355
      %v374 = vpack.c.bf16 %v362, %v362
      %v375 = vpack.c.bf16 %v363, %v363
      %v376 = vld [vmem:[#allocation6] sm:$0xff]
      %v377 = vld [vmem:[#allocation6 + $0x8] sm:$0xff]
      %v378 = vld [vmem:[#allocation6 + $0x10] sm:$0xff]
      %v379 = vld [vmem:[#allocation6 + $0x18] sm:$0xff]
      %v380 = vld [vmem:[#allocation6 + $0x20] sm:$0xff]
      %v381 = vld [vmem:[#allocation6 + $0x28] sm:$0xff]
      %v382 = vld [vmem:[#allocation6 + $0x30] sm:$0xff]
      %v383 = vld [vmem:[#allocation6 + $0x38] sm:$0xff]
      %v384 = vld [vmem:[#allocation6 + $0x40] sm:$0xff]
      %v385 = vld [vmem:[#allocation6 + $0x48] sm:$0xff]
      %v386 = vld [vmem:[#allocation6 + $0x50] sm:$0xff]
      %v387 = vld [vmem:[#allocation6 + $0x58] sm:$0xff]
      %v388 = vld [vmem:[#allocation6 + $0x60] sm:$0xff]
      %v389 = vld [vmem:[#allocation6 + $0x68] sm:$0xff]
      %v390 = vld [vmem:[#allocation6 + $0x70] sm:$0xff]
      %v391 = vld [vmem:[#allocation6 + $0x78] sm:$0xff]
      %v392 = vld [vmem:[#allocation6 + $0x80] sm:$0xff]
      %v393 = vld [vmem:[#allocation6 + $0x88] sm:$0xff]
      %v394 = vld [vmem:[#allocation6 + $0x90] sm:$0xff]
      %v395 = vld [vmem:[#allocation6 + $0x98] sm:$0xff]
      %v396 = vld [vmem:[#allocation6 + $0xa0] sm:$0xff]
      %v397 = vld [vmem:[#allocation6 + $0xa8] sm:$0xff]
      %v398 = vld [vmem:[#allocation6 + $0xb0] sm:$0xff]
      %v399 = vld [vmem:[#allocation6 + $0xb8] sm:$0xff]
      %v400 = vld [vmem:[#allocation6 + $0xc0] sm:$0xff]
      %v401 = vld [vmem:[#allocation6 + $0xc8] sm:$0xff]
      %v402 = vld [vmem:[#allocation6 + $0xd0] sm:$0xff]
      %v403 = vld [vmem:[#allocation6 + $0xd8] sm:$0xff]
      %v404 = vld [vmem:[#allocation6 + $0xe0] sm:$0xff]
      %v405 = vld [vmem:[#allocation6 + $0xe8] sm:$0xff]
      %v406 = vld [vmem:[#allocation6 + $0xf0] sm:$0xff]
      %v407 = vld [vmem:[#allocation6 + $0xf8] sm:$0xff]
      %v408 = vld [vmem:[#allocation6 + $0x100] sm:$0xff]
      %v409 = vld [vmem:[#allocation6 + $0x108] sm:$0xff]
      %v410 = vld [vmem:[#allocation6 + $0x110] sm:$0xff]
      %v411 = vld [vmem:[#allocation6 + $0x118] sm:$0xff]
      %v412 = vld [vmem:[#allocation6 + $0x120] sm:$0xff]
      %v413 = vld [vmem:[#allocation6 + $0x128] sm:$0xff]
      %v414 = vld [vmem:[#allocation6 + $0x130] sm:$0xff]
      %v415 = vld [vmem:[#allocation6 + $0x138] sm:$0xff]
      %v416 = vld [vmem:[#allocation6 + $0x140] sm:$0xff]
      %v417 = vld [vmem:[#allocation6 + $0x148] sm:$0xff]
      %v418 = vld [vmem:[#allocation6 + $0x150] sm:$0xff]
      %v419 = vld [vmem:[#allocation6 + $0x158] sm:$0xff]
      %v420 = vld [vmem:[#allocation6 + $0x160] sm:$0xff]
      %v421 = vld [vmem:[#allocation6 + $0x168] sm:$0xff]
      %v422 = vld [vmem:[#allocation6 + $0x170] sm:$0xff]
      %v423 = vld [vmem:[#allocation6 + $0x178] sm:$0xff]
      %v424 = vld [vmem:[#allocation6 + $0x180] sm:$0xff]
      %v425 = vld [vmem:[#allocation6 + $0x188] sm:$0xff]
      %v426 = vld [vmem:[#allocation6 + $0x190] sm:$0xff]
      %v427 = vld [vmem:[#allocation6 + $0x198] sm:$0xff]
      %v428 = vld [vmem:[#allocation6 + $0x1a0] sm:$0xff]
      %v429 = vld [vmem:[#allocation6 + $0x1a8] sm:$0xff]
      %v430 = vld [vmem:[#allocation6 + $0x1b0] sm:$0xff]
      %v431 = vld [vmem:[#allocation6 + $0x1b8] sm:$0xff]
      %v432 = vld [vmem:[#allocation6 + $0x1c0] sm:$0xff]
      %v433 = vld [vmem:[#allocation6 + $0x1c8] sm:$0xff]
      %v434 = vld [vmem:[#allocation6 + $0x1d0] sm:$0xff]
      %v435 = vld [vmem:[#allocation6 + $0x1d8] sm:$0xff]
      %v436 = vld [vmem:[#allocation6 + $0x1e0] sm:$0xff]
      %v437 = vld [vmem:[#allocation6 + $0x1e8] sm:$0xff]
      %v438 = vld [vmem:[#allocation6 + $0x1f0] sm:$0xff]
      %v439 = vld [vmem:[#allocation6 + $0x1f8] sm:$0xff]
      %v440 = vld [vmem:[#allocation6 + $0x200] sm:$0xff]
      %v441 = vld [vmem:[#allocation6 + $0x208] sm:$0xff]
      %v442 = vld [vmem:[#allocation6 + $0x210] sm:$0xff]
      %v443 = vld [vmem:[#allocation6 + $0x218] sm:$0xff]
      %v444 = vld [vmem:[#allocation6 + $0x220] sm:$0xff]
      %v445 = vld [vmem:[#allocation6 + $0x228] sm:$0xff]
      %v446 = vld [vmem:[#allocation6 + $0x230] sm:$0xff]
      %v447 = vld [vmem:[#allocation6 + $0x238] sm:$0xff]
      %v448 = vld [vmem:[#allocation6 + $0x240] sm:$0xff]
      %v449 = vld [vmem:[#allocation6 + $0x248] sm:$0xff]
      %v450 = vld [vmem:[#allocation6 + $0x250] sm:$0xff]
      %v451 = vld [vmem:[#allocation6 + $0x258] sm:$0xff]
      %v452 = vld [vmem:[#allocation6 + $0x260] sm:$0xff]
      %v453 = vld [vmem:[#allocation6 + $0x268] sm:$0xff]
      %v454 = vld [vmem:[#allocation6 + $0x270] sm:$0xff]
      %v455 = vld [vmem:[#allocation6 + $0x278] sm:$0xff]
      %v456 = vld [vmem:[#allocation6 + $0x280] sm:$0xff]
      %v457 = vld [vmem:[#allocation6 + $0x288] sm:$0xff]
      %v458 = vld [vmem:[#allocation6 + $0x290] sm:$0xff]
      %v459 = vld [vmem:[#allocation6 + $0x298] sm:$0xff]
      %v460 = vld [vmem:[#allocation6 + $0x2a0] sm:$0xff]
      %v461 = vld [vmem:[#allocation6 + $0x2a8] sm:$0xff]
      %v462 = vld [vmem:[#allocation6 + $0x2b0] sm:$0xff]
      %v463 = vld [vmem:[#allocation6 + $0x2b8] sm:$0xff]
      %v464 = vld [vmem:[#allocation6 + $0x2c0] sm:$0xff]
      %v465 = vld [vmem:[#allocation6 + $0x2c8] sm:$0xff]
      %v466 = vld [vmem:[#allocation6 + $0x2d0] sm:$0xff]
      %v467 = vld [vmem:[#allocation6 + $0x2d8] sm:$0xff]
      %v468 = vld [vmem:[#allocation6 + $0x2e0] sm:$0xff]
      %v469 = vld [vmem:[#allocation6 + $0x2e8] sm:$0xff]
      %v470 = vld [vmem:[#allocation6 + $0x2f0] sm:$0xff]
      %v471 = vld [vmem:[#allocation6 + $0x2f8] sm:$0xff]
      %v472 = vld [vmem:[#allocation6 + $0x300] sm:$0xff]
      %v473 = vld [vmem:[#allocation6 + $0x308] sm:$0xff]
      %v474 = vld [vmem:[#allocation6 + $0x310] sm:$0xff]
      %v475 = vld [vmem:[#allocation6 + $0x318] sm:$0xff]
      %v476 = vld [vmem:[#allocation6 + $0x320] sm:$0xff]
      %v477 = vld [vmem:[#allocation6 + $0x328] sm:$0xff]
      %v478 = vld [vmem:[#allocation6 + $0x330] sm:$0xff]
      %v479 = vld [vmem:[#allocation6 + $0x338] sm:$0xff]
      %v480 = vld [vmem:[#allocation6 + $0x340] sm:$0xff]
      %v481 = vld [vmem:[#allocation6 + $0x348] sm:$0xff]
      %v482 = vld [vmem:[#allocation6 + $0x350] sm:$0xff]
      %v483 = vld [vmem:[#allocation6 + $0x358] sm:$0xff]
      %v484 = vld [vmem:[#allocation6 + $0x360] sm:$0xff]
      %v485 = vld [vmem:[#allocation6 + $0x368] sm:$0xff]
      %v486 = vld [vmem:[#allocation6 + $0x370] sm:$0xff]
      %v487 = vld [vmem:[#allocation6 + $0x378] sm:$0xff]
      %v488 = vld [vmem:[#allocation6 + $0x380] sm:$0xff]
      %v489 = vld [vmem:[#allocation6 + $0x388] sm:$0xff]
      %v490 = vld [vmem:[#allocation6 + $0x390] sm:$0xff]
      %v491 = vld [vmem:[#allocation6 + $0x398] sm:$0xff]
      %v492 = vld [vmem:[#allocation6 + $0x3a0] sm:$0xff]
      %v493 = vld [vmem:[#allocation6 + $0x3a8] sm:$0xff]
      %v494 = vld [vmem:[#allocation6 + $0x3b0] sm:$0xff]
      %v495 = vld [vmem:[#allocation6 + $0x3b8] sm:$0xff]
      %v496 = vld [vmem:[#allocation6 + $0x3c0] sm:$0xff]
      %v497 = vld [vmem:[#allocation6 + $0x3c8] sm:$0xff]
      %v498 = vld [vmem:[#allocation6 + $0x3d0] sm:$0xff]
      %v499 = vld [vmem:[#allocation6 + $0x3d8] sm:$0xff]
      %v500 = vld [vmem:[#allocation6 + $0x3e0] sm:$0xff]
      %v501 = vld [vmem:[#allocation6 + $0x3e8] sm:$0xff]
      %v502 = vld [vmem:[#allocation6 + $0x3f0] sm:$0xff]
      %v503 = vld [vmem:[#allocation6 + $0x3f8] sm:$0xff]
      %v504 = vld [vmem:[#allocation6 + $0x400] sm:$0xff]
      %v505 = vld [vmem:[#allocation6 + $0x408] sm:$0xff]
      %v506 = vld [vmem:[#allocation6 + $0x410] sm:$0xff]
      %v507 = vld [vmem:[#allocation6 + $0x418] sm:$0xff]
      %v508 = vld [vmem:[#allocation6 + $0x420] sm:$0xff]
      %v509 = vld [vmem:[#allocation6 + $0x428] sm:$0xff]
      %v510 = vld [vmem:[#allocation6 + $0x430] sm:$0xff]
      %v511 = vld [vmem:[#allocation6 + $0x438] sm:$0xff]
      %v512 = vld [vmem:[#allocation6 + $0x440] sm:$0xff]
      %v513 = vld [vmem:[#allocation6 + $0x448] sm:$0xff]
      %v514 = vld [vmem:[#allocation6 + $0x450] sm:$0xff]
      %v515 = vld [vmem:[#allocation6 + $0x458] sm:$0xff]
      %v516 = vld [vmem:[#allocation6 + $0x460] sm:$0xff]
      %v517 = vld [vmem:[#allocation6 + $0x468] sm:$0xff]
      %v518 = vld [vmem:[#allocation6 + $0x470] sm:$0xff]
      %v519 = vld [vmem:[#allocation6 + $0x478] sm:$0xff]
      %v520 = vld [vmem:[#allocation6 + $0x480] sm:$0xff]
      %v521 = vld [vmem:[#allocation6 + $0x488] sm:$0xff]
      %v522 = vld [vmem:[#allocation6 + $0x490] sm:$0xff]
      %v523 = vld [vmem:[#allocation6 + $0x498] sm:$0xff]
      %v524 = vld [vmem:[#allocation6 + $0x4a0] sm:$0xff]
      %v525 = vld [vmem:[#allocation6 + $0x4a8] sm:$0xff]
      %v526 = vld [vmem:[#allocation6 + $0x4b0] sm:$0xff]
      %v527 = vld [vmem:[#allocation6 + $0x4b8] sm:$0xff]
      %v528 = vld [vmem:[#allocation6 + $0x4c0] sm:$0xff]
      %v529 = vld [vmem:[#allocation6 + $0x4c8] sm:$0xff]
      %v530 = vld [vmem:[#allocation6 + $0x4d0] sm:$0xff]
      %v531 = vld [vmem:[#allocation6 + $0x4d8] sm:$0xff]
      %v532 = vld [vmem:[#allocation6 + $0x4e0] sm:$0xff]
      %v533 = vld [vmem:[#allocation6 + $0x4e8] sm:$0xff]
      %v534 = vld [vmem:[#allocation6 + $0x4f0] sm:$0xff]
      %v535 = vld [vmem:[#allocation6 + $0x4f8] sm:$0xff]
      %v536 = vld [vmem:[#allocation6 + $0x500] sm:$0xff]
      %v537 = vld [vmem:[#allocation6 + $0x508] sm:$0xff]
      %v538 = vld [vmem:[#allocation6 + $0x510] sm:$0xff]
      %v539 = vld [vmem:[#allocation6 + $0x518] sm:$0xff]
      %v540 = vld [vmem:[#allocation6 + $0x520] sm:$0xff]
      %v541 = vld [vmem:[#allocation6 + $0x528] sm:$0xff]
      %v542 = vld [vmem:[#allocation6 + $0x530] sm:$0xff]
      %v543 = vld [vmem:[#allocation6 + $0x538] sm:$0xff]
      %v544 = vld [vmem:[#allocation6 + $0x540] sm:$0xff]
      %v545 = vld [vmem:[#allocation6 + $0x548] sm:$0xff]
      %v546 = vld [vmem:[#allocation6 + $0x550] sm:$0xff]
      %v547 = vld [vmem:[#allocation6 + $0x558] sm:$0xff]
      %v548 = vld [vmem:[#allocation6 + $0x560] sm:$0xff]
      %v549 = vld [vmem:[#allocation6 + $0x568] sm:$0xff]
      %v550 = vld [vmem:[#allocation6 + $0x570] sm:$0xff]
      %v551 = vld [vmem:[#allocation6 + $0x578] sm:$0xff]
      %v552 = vld [vmem:[#allocation6 + $0x580] sm:$0xff]
      %v553 = vld [vmem:[#allocation6 + $0x588] sm:$0xff]
      %v554 = vld [vmem:[#allocation6 + $0x590] sm:$0xff]
      %v555 = vld [vmem:[#allocation6 + $0x598] sm:$0xff]
      %v556 = vld [vmem:[#allocation6 + $0x5a0] sm:$0xff]
      %v557 = vld [vmem:[#allocation6 + $0x5a8] sm:$0xff]
      %v558 = vld [vmem:[#allocation6 + $0x5b0] sm:$0xff]
      %v559 = vld [vmem:[#allocation6 + $0x5b8] sm:$0xff]
      %v560 = vld [vmem:[#allocation6 + $0x5c0] sm:$0xff]
      %v561 = vld [vmem:[#allocation6 + $0x5c8] sm:$0xff]
      %v562 = vld [vmem:[#allocation6 + $0x5d0] sm:$0xff]
      %v563 = vld [vmem:[#allocation6 + $0x5d8] sm:$0xff]
      %v564 = vld [vmem:[#allocation6 + $0x5e0] sm:$0xff]
      %v565 = vld [vmem:[#allocation6 + $0x5e8] sm:$0xff]
      %v566 = vld [vmem:[#allocation6 + $0x5f0] sm:$0xff]
      %v567 = vld [vmem:[#allocation6 + $0x5f8] sm:$0xff]
      %v568 = vld [vmem:[#allocation6 + $0x600] sm:$0xff]
      %v569 = vld [vmem:[#allocation6 + $0x608] sm:$0xff]
      %v570 = vld [vmem:[#allocation6 + $0x610] sm:$0xff]
      %v571 = vld [vmem:[#allocation6 + $0x618] sm:$0xff]
      %v572 = vld [vmem:[#allocation6 + $0x620] sm:$0xff]
      %v573 = vld [vmem:[#allocation6 + $0x628] sm:$0xff]
      %v574 = vld [vmem:[#allocation6 + $0x630] sm:$0xff]
      %v575 = vld [vmem:[#allocation6 + $0x638] sm:$0xff]
      %v576 = vld [vmem:[#allocation6 + $0x640] sm:$0xff]
      %v577 = vld [vmem:[#allocation6 + $0x648] sm:$0xff]
      %v578 = vld [vmem:[#allocation6 + $0x650] sm:$0xff]
      %v579 = vld [vmem:[#allocation6 + $0x658] sm:$0xff]
      %v580 = vld [vmem:[#allocation6 + $0x660] sm:$0xff]
      %v581 = vld [vmem:[#allocation6 + $0x668] sm:$0xff]
      %v582 = vld [vmem:[#allocation6 + $0x670] sm:$0xff]
      %v583 = vld [vmem:[#allocation6 + $0x678] sm:$0xff]
      %v584 = vld [vmem:[#allocation6 + $0x680] sm:$0xff]
      %v585 = vld [vmem:[#allocation6 + $0x688] sm:$0xff]
      %v586 = vld [vmem:[#allocation6 + $0x690] sm:$0xff]
      %v587 = vld [vmem:[#allocation6 + $0x698] sm:$0xff]
      %v588 = vld [vmem:[#allocation6 + $0x6a0] sm:$0xff]
      %v589 = vld [vmem:[#allocation6 + $0x6a8] sm:$0xff]
      %v590 = vld [vmem:[#allocation6 + $0x6b0] sm:$0xff]
      %v591 = vld [vmem:[#allocation6 + $0x6b8] sm:$0xff]
      %v592 = vld [vmem:[#allocation6 + $0x6c0] sm:$0xff]
      %v593 = vld [vmem:[#allocation6 + $0x6c8] sm:$0xff]
      %v594 = vld [vmem:[#allocation6 + $0x6d0] sm:$0xff]
      %v595 = vld [vmem:[#allocation6 + $0x6d8] sm:$0xff]
      %v596 = vld [vmem:[#allocation6 + $0x6e0] sm:$0xff]
      %v597 = vld [vmem:[#allocation6 + $0x6e8] sm:$0xff]
      %v598 = vld [vmem:[#allocation6 + $0x6f0] sm:$0xff]
      %v599 = vld [vmem:[#allocation6 + $0x6f8] sm:$0xff]
      %v600 = vld [vmem:[#allocation6 + $0x700] sm:$0xff]
      %v601 = vld [vmem:[#allocation6 + $0x708] sm:$0xff]
      %v602 = vld [vmem:[#allocation6 + $0x710] sm:$0xff]
      %v603 = vld [vmem:[#allocation6 + $0x718] sm:$0xff]
      %v604 = vld [vmem:[#allocation6 + $0x720] sm:$0xff]
      %v605 = vld [vmem:[#allocation6 + $0x728] sm:$0xff]
      %v606 = vld [vmem:[#allocation6 + $0x730] sm:$0xff]
      %v607 = vld [vmem:[#allocation6 + $0x738] sm:$0xff]
      %v608 = vld [vmem:[#allocation6 + $0x740] sm:$0xff]
      %v609 = vld [vmem:[#allocation6 + $0x748] sm:$0xff]
      %v610 = vld [vmem:[#allocation6 + $0x750] sm:$0xff]
      %v611 = vld [vmem:[#allocation6 + $0x758] sm:$0xff]
      %v612 = vld [vmem:[#allocation6 + $0x760] sm:$0xff]
      %v613 = vld [vmem:[#allocation6 + $0x768] sm:$0xff]
      %v614 = vld [vmem:[#allocation6 + $0x770] sm:$0xff]
      %v615 = vld [vmem:[#allocation6 + $0x778] sm:$0xff]
      %v616 = vld [vmem:[#allocation6 + $0x780] sm:$0xff]
      %v617 = vld [vmem:[#allocation6 + $0x788] sm:$0xff]
      %v618 = vld [vmem:[#allocation6 + $0x790] sm:$0xff]
      %v619 = vld [vmem:[#allocation6 + $0x798] sm:$0xff]
      %v620 = vld [vmem:[#allocation6 + $0x7a0] sm:$0xff]
      %v621 = vld [vmem:[#allocation6 + $0x7a8] sm:$0xff]
      %v622 = vld [vmem:[#allocation6 + $0x7b0] sm:$0xff]
      %v623 = vld [vmem:[#allocation6 + $0x7b8] sm:$0xff]
      %v624 = vld [vmem:[#allocation6 + $0x7c0] sm:$0xff]
      %v625 = vld [vmem:[#allocation6 + $0x7c8] sm:$0xff]
      %v626 = vld [vmem:[#allocation6 + $0x7d0] sm:$0xff]
      %v627 = vld [vmem:[#allocation6 + $0x7d8] sm:$0xff]
      %v628 = vld [vmem:[#allocation6 + $0x7e0] sm:$0xff]
      %v629 = vld [vmem:[#allocation6 + $0x7e8] sm:$0xff]
      %v630 = vld [vmem:[#allocation6 + $0x7f0] sm:$0xff]
      %v631 = vld [vmem:[#allocation6 + $0x7f8] sm:$0xff]
      %v632 = vld [vmem:[#allocation6 + $0x800] sm:$0xff]
      %v633 = vld [vmem:[#allocation6 + $0x808] sm:$0xff]
      %v634 = vld [vmem:[#allocation6 + $0x810] sm:$0xff]
      %v635 = vld [vmem:[#allocation6 + $0x818] sm:$0xff]
      %v636 = vld [vmem:[#allocation6 + $0x820] sm:$0xff]
      %v637 = vld [vmem:[#allocation6 + $0x828] sm:$0xff]
      %v638 = vld [vmem:[#allocation6 + $0x830] sm:$0xff]
      %v639 = vld [vmem:[#allocation6 + $0x838] sm:$0xff]
      %v640 = vld [vmem:[#allocation6 + $0x840] sm:$0xff]
      %v641 = vld [vmem:[#allocation6 + $0x848] sm:$0xff]
      %v642 = vld [vmem:[#allocation6 + $0x850] sm:$0xff]
      %v643 = vld [vmem:[#allocation6 + $0x858] sm:$0xff]
      %v644 = vld [vmem:[#allocation6 + $0x860] sm:$0xff]
      %v645 = vld [vmem:[#allocation6 + $0x868] sm:$0xff]
      %v646 = vld [vmem:[#allocation6 + $0x870] sm:$0xff]
      %v647 = vld [vmem:[#allocation6 + $0x878] sm:$0xff]
      %v648 = vld [vmem:[#allocation6 + $0x880] sm:$0xff]
      %v649 = vld [vmem:[#allocation6 + $0x888] sm:$0xff]
      %v650 = vld [vmem:[#allocation6 + $0x890] sm:$0xff]
      %v651 = vld [vmem:[#allocation6 + $0x898] sm:$0xff]
      %v652 = vld [vmem:[#allocation6 + $0x8a0] sm:$0xff]
      %v653 = vld [vmem:[#allocation6 + $0x8a8] sm:$0xff]
      %v654 = vld [vmem:[#allocation6 + $0x8b0] sm:$0xff]
      %v655 = vld [vmem:[#allocation6 + $0x8b8] sm:$0xff]
      %v656 = vld [vmem:[#allocation6 + $0x8c0] sm:$0xff]
      %v657 = vld [vmem:[#allocation6 + $0x8c8] sm:$0xff]
      %v658 = vld [vmem:[#allocation6 + $0x8d0] sm:$0xff]
      %v659 = vld [vmem:[#allocation6 + $0x8d8] sm:$0xff]
      %v660 = vld [vmem:[#allocation6 + $0x8e0] sm:$0xff]
      %v661 = vld [vmem:[#allocation6 + $0x8e8] sm:$0xff]
      %v662 = vld [vmem:[#allocation6 + $0x8f0] sm:$0xff]
      %v663 = vld [vmem:[#allocation6 + $0x8f8] sm:$0xff]
      %v664 = vld [vmem:[#allocation8] sm:$0x3f]
      %v666 = vlaneseq
      %v667 = vshrl.u32 %v666, 7
      %v668 = vsub.s32 0, %v667
      %v669 = vrot.slane %v664, %v668
      %v670 = vlaneseq
      %v671 = vshrl.u32 %v670, 7
      %v672 = vsub.s32 1, %v671
      %v673 = vrot.slane %v664, %v672
      %v674 = vlaneseq
      %v675 = vshrl.u32 %v674, 7
      %v676 = vsub.s32 2, %v675
      %v677 = vrot.slane %v664, %v676
      %v678 = vlaneseq
      %v679 = vshrl.u32 %v678, 7
      %v680 = vsub.s32 3, %v679
      %v681 = vrot.slane %v664, %v680
      %v682 = vlaneseq
      %v683 = vshrl.u32 %v682, 7
      %v684 = vsub.s32 4, %v683
      %v685 = vrot.slane %v664, %v684
      %v686 = vlaneseq
      %v687 = vshrl.u32 %v686, 7
      %v688 = vsub.s32 5, %v687
      %v689 = vrot.slane %v664, %v688
      %v984 = vunpack.c.l.b16 %v376
      %v985 = vunpack.c.h.b16 %v376
      %v986 = vunpack.c.l.b16 %v377
      %v987 = vunpack.c.h.b16 %v377
      %v988 = vunpack.c.l.b16 %v378
      %v989 = vunpack.c.h.b16 %v378
      %v990 = vunpack.c.l.b16 %v379
      %v991 = vunpack.c.h.b16 %v379
      %v992 = vunpack.c.l.b16 %v380
      %v993 = vunpack.c.h.b16 %v380
      %v994 = vunpack.c.l.b16 %v381
      %v995 = vunpack.c.h.b16 %v381
      %v996 = vunpack.c.l.b16 %v382
      %v997 = vunpack.c.h.b16 %v382
      %v998 = vunpack.c.l.b16 %v383
      %v999 = vunpack.c.h.b16 %v383
      %v1000 = vunpack.c.l.b16 %v384
      %v1001 = vunpack.c.h.b16 %v384
      %v1002 = vunpack.c.l.b16 %v385
      %v1003 = vunpack.c.h.b16 %v385
      %v1004 = vunpack.c.l.b16 %v386
      %v1005 = vunpack.c.h.b16 %v386
      %v1006 = vunpack.c.l.b16 %v387
      %v1007 = vunpack.c.h.b16 %v387
      %v1008 = vunpack.c.l.b16 %v388
      %v1009 = vunpack.c.h.b16 %v388
      %v1010 = vunpack.c.l.b16 %v389
      %v1011 = vunpack.c.h.b16 %v389
      %v1012 = vunpack.c.l.b16 %v390
      %v1013 = vunpack.c.h.b16 %v390
      %v1014 = vunpack.c.l.b16 %v391
      %v1015 = vunpack.c.h.b16 %v391
      %v1016 = vunpack.c.l.b16 %v392
      %v1017 = vunpack.c.h.b16 %v392
      %v1018 = vunpack.c.l.b16 %v393
      %v1019 = vunpack.c.h.b16 %v393
      %v1020 = vunpack.c.l.b16 %v394
      %v1021 = vunpack.c.h.b16 %v394
      %v1022 = vunpack.c.l.b16 %v395
      %v1023 = vunpack.c.h.b16 %v395
      %v1024 = vunpack.c.l.b16 %v396
      %v1025 = vunpack.c.h.b16 %v396
      %v1026 = vunpack.c.l.b16 %v397
      %v1027 = vunpack.c.h.b16 %v397
      %v1028 = vunpack.c.l.b16 %v398
      %v1029 = vunpack.c.h.b16 %v398
      %v1030 = vunpack.c.l.b16 %v399
      %v1031 = vunpack.c.h.b16 %v399
      %v1032 = vunpack.c.l.b16 %v400
      %v1033 = vunpack.c.h.b16 %v400
      %v1034 = vunpack.c.l.b16 %v401
      %v1035 = vunpack.c.h.b16 %v401
      %v1036 = vunpack.c.l.b16 %v402
      %v1037 = vunpack.c.h.b16 %v402
      %v1038 = vunpack.c.l.b16 %v403
      %v1039 = vunpack.c.h.b16 %v403
      %v1040 = vunpack.c.l.b16 %v404
      %v1041 = vunpack.c.h.b16 %v404
      %v1042 = vunpack.c.l.b16 %v405
      %v1043 = vunpack.c.h.b16 %v405
      %v1044 = vunpack.c.l.b16 %v406
      %v1045 = vunpack.c.h.b16 %v406
      %v1046 = vunpack.c.l.b16 %v407
      %v1047 = vunpack.c.h.b16 %v407
      %v1048 = vunpack.c.l.b16 %v408
      %v1049 = vunpack.c.h.b16 %v408
      %v1050 = vunpack.c.l.b16 %v409
      %v1051 = vunpack.c.h.b16 %v409
      %v1052 = vunpack.c.l.b16 %v410
      %v1053 = vunpack.c.h.b16 %v410
      %v1054 = vunpack.c.l.b16 %v411
      %v1055 = vunpack.c.h.b16 %v411
      %v1056 = vunpack.c.l.b16 %v412
      %v1057 = vunpack.c.h.b16 %v412
      %v1058 = vunpack.c.l.b16 %v413
      %v1059 = vunpack.c.h.b16 %v413
      %v1060 = vunpack.c.l.b16 %v414
      %v1061 = vunpack.c.h.b16 %v414
      %v1062 = vunpack.c.l.b16 %v415
      %v1063 = vunpack.c.h.b16 %v415
      %v1064 = vunpack.c.l.b16 %v416
      %v1065 = vunpack.c.h.b16 %v416
      %v1066 = vunpack.c.l.b16 %v417
      %v1067 = vunpack.c.h.b16 %v417
      %v1068 = vunpack.c.l.b16 %v418
      %v1069 = vunpack.c.h.b16 %v418
      %v1070 = vunpack.c.l.b16 %v419
      %v1071 = vunpack.c.h.b16 %v419
      %v1072 = vunpack.c.l.b16 %v420
      %v1073 = vunpack.c.h.b16 %v420
      %v1074 = vunpack.c.l.b16 %v421
      %v1075 = vunpack.c.h.b16 %v421
      %v1076 = vunpack.c.l.b16 %v422
      %v1077 = vunpack.c.h.b16 %v422
      %v1078 = vunpack.c.l.b16 %v423
      %v1079 = vunpack.c.h.b16 %v423
      %v1080 = vunpack.c.l.b16 %v424
      %v1081 = vunpack.c.h.b16 %v424
      %v1082 = vunpack.c.l.b16 %v425
      %v1083 = vunpack.c.h.b16 %v425
      %v1084 = vunpack.c.l.b16 %v426
      %v1085 = vunpack.c.h.b16 %v426
      %v1086 = vunpack.c.l.b16 %v427
      %v1087 = vunpack.c.h.b16 %v427
      %v1088 = vunpack.c.l.b16 %v428
      %v1089 = vunpack.c.h.b16 %v428
      %v1090 = vunpack.c.l.b16 %v429
      %v1091 = vunpack.c.h.b16 %v429
      %v1092 = vunpack.c.l.b16 %v430
      %v1093 = vunpack.c.h.b16 %v430
      %v1094 = vunpack.c.l.b16 %v431
      %v1095 = vunpack.c.h.b16 %v431
      %v1096 = vunpack.c.l.b16 %v432
      %v1097 = vunpack.c.h.b16 %v432
      %v1098 = vunpack.c.l.b16 %v433
      %v1099 = vunpack.c.h.b16 %v433
      %v1100 = vunpack.c.l.b16 %v434
      %v1101 = vunpack.c.h.b16 %v434
      %v1102 = vunpack.c.l.b16 %v435
      %v1103 = vunpack.c.h.b16 %v435
      %v1104 = vunpack.c.l.b16 %v436
      %v1105 = vunpack.c.h.b16 %v436
      %v1106 = vunpack.c.l.b16 %v437
      %v1107 = vunpack.c.h.b16 %v437
      %v1108 = vunpack.c.l.b16 %v438
      %v1109 = vunpack.c.h.b16 %v438
      %v1110 = vunpack.c.l.b16 %v439
      %v1111 = vunpack.c.h.b16 %v439
      %v1112 = vunpack.c.l.b16 %v440
      %v1113 = vunpack.c.h.b16 %v440
      %v1114 = vunpack.c.l.b16 %v441
      %v1115 = vunpack.c.h.b16 %v441
      %v1116 = vunpack.c.l.b16 %v442
      %v1117 = vunpack.c.h.b16 %v442
      %v1118 = vunpack.c.l.b16 %v443
      %v1119 = vunpack.c.h.b16 %v443
      %v1120 = vunpack.c.l.b16 %v444
      %v1121 = vunpack.c.h.b16 %v444
      %v1122 = vunpack.c.l.b16 %v445
      %v1123 = vunpack.c.h.b16 %v445
      %v1124 = vunpack.c.l.b16 %v446
      %v1125 = vunpack.c.h.b16 %v446
      %v1126 = vunpack.c.l.b16 %v447
      %v1127 = vunpack.c.h.b16 %v447
      %v1128 = vunpack.c.l.b16 %v448
      %v1129 = vunpack.c.h.b16 %v448
      %v1130 = vunpack.c.l.b16 %v449
      %v1131 = vunpack.c.h.b16 %v449
      %v1132 = vunpack.c.l.b16 %v450
      %v1133 = vunpack.c.h.b16 %v450
      %v1134 = vunpack.c.l.b16 %v451
      %v1135 = vunpack.c.h.b16 %v451
      %v1136 = vunpack.c.l.b16 %v452
      %v1137 = vunpack.c.h.b16 %v452
      %v1138 = vunpack.c.l.b16 %v453
      %v1139 = vunpack.c.h.b16 %v453
      %v1140 = vunpack.c.l.b16 %v454
      %v1141 = vunpack.c.h.b16 %v454
      %v1142 = vunpack.c.l.b16 %v455
      %v1143 = vunpack.c.h.b16 %v455
      %v1144 = vunpack.c.l.b16 %v456
      %v1145 = vunpack.c.h.b16 %v456
      %v1146 = vunpack.c.l.b16 %v457
      %v1147 = vunpack.c.h.b16 %v457
      %v1148 = vunpack.c.l.b16 %v458
      %v1149 = vunpack.c.h.b16 %v458
      %v1150 = vunpack.c.l.b16 %v459
      %v1151 = vunpack.c.h.b16 %v459
      %v1152 = vunpack.c.l.b16 %v460
      %v1153 = vunpack.c.h.b16 %v460
      %v1154 = vunpack.c.l.b16 %v461
      %v1155 = vunpack.c.h.b16 %v461
      %v1156 = vunpack.c.l.b16 %v462
      %v1157 = vunpack.c.h.b16 %v462
      %v1158 = vunpack.c.l.b16 %v463
      %v1159 = vunpack.c.h.b16 %v463
      %v1160 = vunpack.c.l.b16 %v464
      %v1161 = vunpack.c.h.b16 %v464
      %v1162 = vunpack.c.l.b16 %v465
      %v1163 = vunpack.c.h.b16 %v465
      %v1164 = vunpack.c.l.b16 %v466
      %v1165 = vunpack.c.h.b16 %v466
      %v1166 = vunpack.c.l.b16 %v467
      %v1167 = vunpack.c.h.b16 %v467
      %v1168 = vunpack.c.l.b16 %v468
      %v1169 = vunpack.c.h.b16 %v468
      %v1170 = vunpack.c.l.b16 %v469
      %v1171 = vunpack.c.h.b16 %v469
      %v1172 = vunpack.c.l.b16 %v470
      %v1173 = vunpack.c.h.b16 %v470
      %v1174 = vunpack.c.l.b16 %v471
      %v1175 = vunpack.c.h.b16 %v471
      %v1176 = vunpack.c.l.b16 %v472
      %v1177 = vunpack.c.h.b16 %v472
      %v1178 = vunpack.c.l.b16 %v473
      %v1179 = vunpack.c.h.b16 %v473
      %v1180 = vunpack.c.l.b16 %v474
      %v1181 = vunpack.c.h.b16 %v474
      %v1182 = vunpack.c.l.b16 %v475
      %v1183 = vunpack.c.h.b16 %v475
      %v1184 = vunpack.c.l.b16 %v476
      %v1185 = vunpack.c.h.b16 %v476
      %v1186 = vunpack.c.l.b16 %v477
      %v1187 = vunpack.c.h.b16 %v477
      %v1188 = vunpack.c.l.b16 %v478
      %v1189 = vunpack.c.h.b16 %v478
      %v1190 = vunpack.c.l.b16 %v479
      %v1191 = vunpack.c.h.b16 %v479
      %v1192 = vunpack.c.l.b16 %v480
      %v1193 = vunpack.c.h.b16 %v480
      %v1194 = vunpack.c.l.b16 %v481
      %v1195 = vunpack.c.h.b16 %v481
      %v1196 = vunpack.c.l.b16 %v482
      %v1197 = vunpack.c.h.b16 %v482
      %v1198 = vunpack.c.l.b16 %v483
      %v1199 = vunpack.c.h.b16 %v483
      %v1200 = vunpack.c.l.b16 %v484
      %v1201 = vunpack.c.h.b16 %v484
      %v1202 = vunpack.c.l.b16 %v485
      %v1203 = vunpack.c.h.b16 %v485
      %v1204 = vunpack.c.l.b16 %v486
      %v1205 = vunpack.c.h.b16 %v486
      %v1206 = vunpack.c.l.b16 %v487
      %v1207 = vunpack.c.h.b16 %v487
      %v1208 = vunpack.c.l.b16 %v488
      %v1209 = vunpack.c.h.b16 %v488
      %v1210 = vunpack.c.l.b16 %v489
      %v1211 = vunpack.c.h.b16 %v489
      %v1212 = vunpack.c.l.b16 %v490
      %v1213 = vunpack.c.h.b16 %v490
      %v1214 = vunpack.c.l.b16 %v491
      %v1215 = vunpack.c.h.b16 %v491
      %v1216 = vunpack.c.l.b16 %v492
      %v1217 = vunpack.c.h.b16 %v492
      %v1218 = vunpack.c.l.b16 %v493
      %v1219 = vunpack.c.h.b16 %v493
      %v1220 = vunpack.c.l.b16 %v494
      %v1221 = vunpack.c.h.b16 %v494
      %v1222 = vunpack.c.l.b16 %v495
      %v1223 = vunpack.c.h.b16 %v495
      %v1224 = vunpack.c.l.b16 %v496
      %v1225 = vunpack.c.h.b16 %v496
      %v1226 = vunpack.c.l.b16 %v497
      %v1227 = vunpack.c.h.b16 %v497
      %v1228 = vunpack.c.l.b16 %v498
      %v1229 = vunpack.c.h.b16 %v498
      %v1230 = vunpack.c.l.b16 %v499
      %v1231 = vunpack.c.h.b16 %v499
      %v1232 = vunpack.c.l.b16 %v500
      %v1233 = vunpack.c.h.b16 %v500
      %v1234 = vunpack.c.l.b16 %v501
      %v1235 = vunpack.c.h.b16 %v501
      %v1236 = vunpack.c.l.b16 %v502
      %v1237 = vunpack.c.h.b16 %v502
      %v1238 = vunpack.c.l.b16 %v503
      %v1239 = vunpack.c.h.b16 %v503
      %v1240 = vunpack.c.l.b16 %v504
      %v1241 = vunpack.c.h.b16 %v504
      %v1242 = vunpack.c.l.b16 %v505
      %v1243 = vunpack.c.h.b16 %v505
      %v1244 = vunpack.c.l.b16 %v506
      %v1245 = vunpack.c.h.b16 %v506
      %v1246 = vunpack.c.l.b16 %v507
      %v1247 = vunpack.c.h.b16 %v507
      %v1248 = vunpack.c.l.b16 %v508
      %v1249 = vunpack.c.h.b16 %v508
      %v1250 = vunpack.c.l.b16 %v509
      %v1251 = vunpack.c.h.b16 %v509
      %v1252 = vunpack.c.l.b16 %v510
      %v1253 = vunpack.c.h.b16 %v510
      %v1254 = vunpack.c.l.b16 %v511
      %v1255 = vunpack.c.h.b16 %v511
      %v1256 = vunpack.c.l.b16 %v512
      %v1257 = vunpack.c.h.b16 %v512
      %v1258 = vunpack.c.l.b16 %v513
      %v1259 = vunpack.c.h.b16 %v513
      %v1260 = vunpack.c.l.b16 %v514
      %v1261 = vunpack.c.h.b16 %v514
      %v1262 = vunpack.c.l.b16 %v515
      %v1263 = vunpack.c.h.b16 %v515
      %v1264 = vunpack.c.l.b16 %v516
      %v1265 = vunpack.c.h.b16 %v516
      %v1266 = vunpack.c.l.b16 %v517
      %v1267 = vunpack.c.h.b16 %v517
      %v1268 = vunpack.c.l.b16 %v518
      %v1269 = vunpack.c.h.b16 %v518
      %v1270 = vunpack.c.l.b16 %v519
      %v1271 = vunpack.c.h.b16 %v519
      %v1272 = vunpack.c.l.b16 %v520
      %v1273 = vunpack.c.h.b16 %v520
      %v1274 = vunpack.c.l.b16 %v521
      %v1275 = vunpack.c.h.b16 %v521
      %v1276 = vunpack.c.l.b16 %v522
      %v1277 = vunpack.c.h.b16 %v522
      %v1278 = vunpack.c.l.b16 %v523
      %v1279 = vunpack.c.h.b16 %v523
      %v1280 = vunpack.c.l.b16 %v524
      %v1281 = vunpack.c.h.b16 %v524
      %v1282 = vunpack.c.l.b16 %v525
      %v1283 = vunpack.c.h.b16 %v525
      %v1284 = vunpack.c.l.b16 %v526
      %v1285 = vunpack.c.h.b16 %v526
      %v1286 = vunpack.c.l.b16 %v527
      %v1287 = vunpack.c.h.b16 %v527
      %v1288 = vunpack.c.l.b16 %v528
      %v1289 = vunpack.c.h.b16 %v528
      %v1290 = vunpack.c.l.b16 %v529
      %v1291 = vunpack.c.h.b16 %v529
      %v1292 = vunpack.c.l.b16 %v530
      %v1293 = vunpack.c.h.b16 %v530
      %v1294 = vunpack.c.l.b16 %v531
      %v1295 = vunpack.c.h.b16 %v531
      %v1296 = vunpack.c.l.b16 %v532
      %v1297 = vunpack.c.h.b16 %v532
      %v1298 = vunpack.c.l.b16 %v533
      %v1299 = vunpack.c.h.b16 %v533
      %v1300 = vunpack.c.l.b16 %v534
      %v1301 = vunpack.c.h.b16 %v534
      %v1302 = vunpack.c.l.b16 %v535
      %v1303 = vunpack.c.h.b16 %v535
      %v1304 = vunpack.c.l.b16 %v536
      %v1305 = vunpack.c.h.b16 %v536
      %v1306 = vunpack.c.l.b16 %v537
      %v1307 = vunpack.c.h.b16 %v537
      %v1308 = vunpack.c.l.b16 %v538
      %v1309 = vunpack.c.h.b16 %v538
      %v1310 = vunpack.c.l.b16 %v539
      %v1311 = vunpack.c.h.b16 %v539
      %v1312 = vunpack.c.l.b16 %v540
      %v1313 = vunpack.c.h.b16 %v540
      %v1314 = vunpack.c.l.b16 %v541
      %v1315 = vunpack.c.h.b16 %v541
      %v1316 = vunpack.c.l.b16 %v542
      %v1317 = vunpack.c.h.b16 %v542
      %v1318 = vunpack.c.l.b16 %v543
      %v1319 = vunpack.c.h.b16 %v543
      %v1320 = vunpack.c.l.b16 %v544
      %v1321 = vunpack.c.h.b16 %v544
      %v1322 = vunpack.c.l.b16 %v545
      %v1323 = vunpack.c.h.b16 %v545
      %v1324 = vunpack.c.l.b16 %v546
      %v1325 = vunpack.c.h.b16 %v546
      %v1326 = vunpack.c.l.b16 %v547
      %v1327 = vunpack.c.h.b16 %v547
      %v1328 = vunpack.c.l.b16 %v548
      %v1329 = vunpack.c.h.b16 %v548
      %v1330 = vunpack.c.l.b16 %v549
      %v1331 = vunpack.c.h.b16 %v549
      %v1332 = vunpack.c.l.b16 %v550
      %v1333 = vunpack.c.h.b16 %v550
      %v1334 = vunpack.c.l.b16 %v551
      %v1335 = vunpack.c.h.b16 %v551
      %v1336 = vunpack.c.l.b16 %v552
      %v1337 = vunpack.c.h.b16 %v552
      %v1338 = vunpack.c.l.b16 %v553
      %v1339 = vunpack.c.h.b16 %v553
      %v1340 = vunpack.c.l.b16 %v554
      %v1341 = vunpack.c.h.b16 %v554
      %v1342 = vunpack.c.l.b16 %v555
      %v1343 = vunpack.c.h.b16 %v555
      %v1344 = vunpack.c.l.b16 %v556
      %v1345 = vunpack.c.h.b16 %v556
      %v1346 = vunpack.c.l.b16 %v557
      %v1347 = vunpack.c.h.b16 %v557
      %v1348 = vunpack.c.l.b16 %v558
      %v1349 = vunpack.c.h.b16 %v558
      %v1350 = vunpack.c.l.b16 %v559
      %v1351 = vunpack.c.h.b16 %v559
      %v1352 = vunpack.c.l.b16 %v560
      %v1353 = vunpack.c.h.b16 %v560
      %v1354 = vunpack.c.l.b16 %v561
      %v1355 = vunpack.c.h.b16 %v561
      %v1356 = vunpack.c.l.b16 %v562
      %v1357 = vunpack.c.h.b16 %v562
      %v1358 = vunpack.c.l.b16 %v563
      %v1359 = vunpack.c.h.b16 %v563
      %v1360 = vunpack.c.l.b16 %v564
      %v1361 = vunpack.c.h.b16 %v564
      %v1362 = vunpack.c.l.b16 %v565
      %v1363 = vunpack.c.h.b16 %v565
      %v1364 = vunpack.c.l.b16 %v566
      %v1365 = vunpack.c.h.b16 %v566
      %v1366 = vunpack.c.l.b16 %v567
      %v1367 = vunpack.c.h.b16 %v567
      %v1368 = vunpack.c.l.b16 %v568
      %v1369 = vunpack.c.h.b16 %v568
      %v1370 = vunpack.c.l.b16 %v569
      %v1371 = vunpack.c.h.b16 %v569
      %v1372 = vunpack.c.l.b16 %v570
      %v1373 = vunpack.c.h.b16 %v570
      %v1374 = vunpack.c.l.b16 %v571
      %v1375 = vunpack.c.h.b16 %v571
      %v1376 = vunpack.c.l.b16 %v572
      %v1377 = vunpack.c.h.b16 %v572
      %v1378 = vunpack.c.l.b16 %v573
      %v1379 = vunpack.c.h.b16 %v573
      %v1380 = vunpack.c.l.b16 %v574
      %v1381 = vunpack.c.h.b16 %v574
      %v1382 = vunpack.c.l.b16 %v575
      %v1383 = vunpack.c.h.b16 %v575
      %v1384 = vunpack.c.l.b16 %v576
      %v1385 = vunpack.c.h.b16 %v576
      %v1386 = vunpack.c.l.b16 %v577
      %v1387 = vunpack.c.h.b16 %v577
      %v1388 = vunpack.c.l.b16 %v578
      %v1389 = vunpack.c.h.b16 %v578
      %v1390 = vunpack.c.l.b16 %v579
      %v1391 = vunpack.c.h.b16 %v579
      %v1392 = vunpack.c.l.b16 %v580
      %v1393 = vunpack.c.h.b16 %v580
      %v1394 = vunpack.c.l.b16 %v581
      %v1395 = vunpack.c.h.b16 %v581
      %v1396 = vunpack.c.l.b16 %v582
      %v1397 = vunpack.c.h.b16 %v582
      %v1398 = vunpack.c.l.b16 %v583
      %v1399 = vunpack.c.h.b16 %v583
      %v1400 = vunpack.c.l.b16 %v584
      %v1401 = vunpack.c.h.b16 %v584
      %v1402 = vunpack.c.l.b16 %v585
      %v1403 = vunpack.c.h.b16 %v585
      %v1404 = vunpack.c.l.b16 %v586
      %v1405 = vunpack.c.h.b16 %v586
      %v1406 = vunpack.c.l.b16 %v587
      %v1407 = vunpack.c.h.b16 %v587
      %v1408 = vunpack.c.l.b16 %v588
      %v1409 = vunpack.c.h.b16 %v588
      %v1410 = vunpack.c.l.b16 %v589
      %v1411 = vunpack.c.h.b16 %v589
      %v1412 = vunpack.c.l.b16 %v590
      %v1413 = vunpack.c.h.b16 %v590
      %v1414 = vunpack.c.l.b16 %v591
      %v1415 = vunpack.c.h.b16 %v591
      %v1416 = vunpack.c.l.b16 %v592
      %v1417 = vunpack.c.h.b16 %v592
      %v1418 = vunpack.c.l.b16 %v593
      %v1419 = vunpack.c.h.b16 %v593
      %v1420 = vunpack.c.l.b16 %v594
      %v1421 = vunpack.c.h.b16 %v594
      %v1422 = vunpack.c.l.b16 %v595
      %v1423 = vunpack.c.h.b16 %v595
      %v1424 = vunpack.c.l.b16 %v596
      %v1425 = vunpack.c.h.b16 %v596
      %v1426 = vunpack.c.l.b16 %v597
      %v1427 = vunpack.c.h.b16 %v597
      %v1428 = vunpack.c.l.b16 %v598
      %v1429 = vunpack.c.h.b16 %v598
      %v1430 = vunpack.c.l.b16 %v599
      %v1431 = vunpack.c.h.b16 %v599
      %v1432 = vunpack.c.l.b16 %v600
      %v1433 = vunpack.c.h.b16 %v600
      %v1434 = vunpack.c.l.b16 %v601
      %v1435 = vunpack.c.h.b16 %v601
      %v1436 = vunpack.c.l.b16 %v602
      %v1437 = vunpack.c.h.b16 %v602
      %v1438 = vunpack.c.l.b16 %v603
      %v1439 = vunpack.c.h.b16 %v603
      %v1440 = vunpack.c.l.b16 %v604
      %v1441 = vunpack.c.h.b16 %v604
      %v1442 = vunpack.c.l.b16 %v605
      %v1443 = vunpack.c.h.b16 %v605
      %v1444 = vunpack.c.l.b16 %v606
      %v1445 = vunpack.c.h.b16 %v606
      %v1446 = vunpack.c.l.b16 %v607
      %v1447 = vunpack.c.h.b16 %v607
      %v1448 = vunpack.c.l.b16 %v608
      %v1449 = vunpack.c.h.b16 %v608
      %v1450 = vunpack.c.l.b16 %v609
      %v1451 = vunpack.c.h.b16 %v609
      %v1452 = vunpack.c.l.b16 %v610
      %v1453 = vunpack.c.h.b16 %v610
      %v1454 = vunpack.c.l.b16 %v611
      %v1455 = vunpack.c.h.b16 %v611
      %v1456 = vunpack.c.l.b16 %v612
      %v1457 = vunpack.c.h.b16 %v612
      %v1458 = vunpack.c.l.b16 %v613
      %v1459 = vunpack.c.h.b16 %v613
      %v1460 = vunpack.c.l.b16 %v614
      %v1461 = vunpack.c.h.b16 %v614
      %v1462 = vunpack.c.l.b16 %v615
      %v1463 = vunpack.c.h.b16 %v615
      %v1464 = vunpack.c.l.b16 %v616
      %v1465 = vunpack.c.h.b16 %v616
      %v1466 = vunpack.c.l.b16 %v617
      %v1467 = vunpack.c.h.b16 %v617
      %v1468 = vunpack.c.l.b16 %v618
      %v1469 = vunpack.c.h.b16 %v618
      %v1470 = vunpack.c.l.b16 %v619
      %v1471 = vunpack.c.h.b16 %v619
      %v1472 = vunpack.c.l.b16 %v620
      %v1473 = vunpack.c.h.b16 %v620
      %v1474 = vunpack.c.l.b16 %v621
      %v1475 = vunpack.c.h.b16 %v621
      %v1476 = vunpack.c.l.b16 %v622
      %v1477 = vunpack.c.h.b16 %v622
      %v1478 = vunpack.c.l.b16 %v623
      %v1479 = vunpack.c.h.b16 %v623
      %v1480 = vunpack.c.l.b16 %v624
      %v1481 = vunpack.c.h.b16 %v624
      %v1482 = vunpack.c.l.b16 %v625
      %v1483 = vunpack.c.h.b16 %v625
      %v1484 = vunpack.c.l.b16 %v626
      %v1485 = vunpack.c.h.b16 %v626
      %v1486 = vunpack.c.l.b16 %v627
      %v1487 = vunpack.c.h.b16 %v627
      %v1488 = vunpack.c.l.b16 %v628
      %v1489 = vunpack.c.h.b16 %v628
      %v1490 = vunpack.c.l.b16 %v629
      %v1491 = vunpack.c.h.b16 %v629
      %v1492 = vunpack.c.l.b16 %v630
      %v1493 = vunpack.c.h.b16 %v630
      %v1494 = vunpack.c.l.b16 %v631
      %v1495 = vunpack.c.h.b16 %v631
      %v1496 = vunpack.c.l.b16 %v632
      %v1497 = vunpack.c.h.b16 %v632
      %v1498 = vunpack.c.l.b16 %v633
      %v1499 = vunpack.c.h.b16 %v633
      %v1500 = vunpack.c.l.b16 %v634
      %v1501 = vunpack.c.h.b16 %v634
      %v1502 = vunpack.c.l.b16 %v635
      %v1503 = vunpack.c.h.b16 %v635
      %v1504 = vunpack.c.l.b16 %v636
      %v1505 = vunpack.c.h.b16 %v636
      %v1506 = vunpack.c.l.b16 %v637
      %v1507 = vunpack.c.h.b16 %v637
      %v1508 = vunpack.c.l.b16 %v638
      %v1509 = vunpack.c.h.b16 %v638
      %v1510 = vunpack.c.l.b16 %v639
      %v1511 = vunpack.c.h.b16 %v639
      %v1512 = vunpack.c.l.b16 %v640
      %v1513 = vunpack.c.h.b16 %v640
      %v1514 = vunpack.c.l.b16 %v641
      %v1515 = vunpack.c.h.b16 %v641
      %v1516 = vunpack.c.l.b16 %v642
      %v1517 = vunpack.c.h.b16 %v642
      %v1518 = vunpack.c.l.b16 %v643
      %v1519 = vunpack.c.h.b16 %v643
      %v1520 = vunpack.c.l.b16 %v644
      %v1521 = vunpack.c.h.b16 %v644
      %v1522 = vunpack.c.l.b16 %v645
      %v1523 = vunpack.c.h.b16 %v645
      %v1524 = vunpack.c.l.b16 %v646
      %v1525 = vunpack.c.h.b16 %v646
      %v1526 = vunpack.c.l.b16 %v647
      %v1527 = vunpack.c.h.b16 %v647
      %v1528 = vunpack.c.l.b16 %v648
      %v1529 = vunpack.c.h.b16 %v648
      %v1530 = vunpack.c.l.b16 %v649
      %v1531 = vunpack.c.h.b16 %v649
      %v1532 = vunpack.c.l.b16 %v650
      %v1533 = vunpack.c.h.b16 %v650
      %v1534 = vunpack.c.l.b16 %v651
      %v1535 = vunpack.c.h.b16 %v651
      %v1536 = vunpack.c.l.b16 %v652
      %v1537 = vunpack.c.h.b16 %v652
      %v1538 = vunpack.c.l.b16 %v653
      %v1539 = vunpack.c.h.b16 %v653
      %v1540 = vunpack.c.l.b16 %v654
      %v1541 = vunpack.c.h.b16 %v654
      %v1542 = vunpack.c.l.b16 %v655
      %v1543 = vunpack.c.h.b16 %v655
      %v1544 = vunpack.c.l.b16 %v656
      %v1545 = vunpack.c.h.b16 %v656
      %v1546 = vunpack.c.l.b16 %v657
      %v1547 = vunpack.c.h.b16 %v657
      %v1548 = vunpack.c.l.b16 %v658
      %v1549 = vunpack.c.h.b16 %v658
      %v1550 = vunpack.c.l.b16 %v659
      %v1551 = vunpack.c.h.b16 %v659
      %v1552 = vunpack.c.l.b16 %v660
      %v1553 = vunpack.c.h.b16 %v660
      %v1554 = vunpack.c.l.b16 %v661
      %v1555 = vunpack.c.h.b16 %v661
      %v1556 = vunpack.c.l.b16 %v662
      %v1557 = vunpack.c.h.b16 %v662
      %v1558 = vunpack.c.l.b16 %v663
      %v1559 = vunpack.c.h.b16 %v663
      %v1560 = vpack.c.b16 %v990, %v984
      %v1561 = vpack.c.b16 %v991, %v985
      %v1562 = vpack.c.b16 %v992, %v986
      %v1563 = vpack.c.b16 %v993, %v987
      %v1564 = vpack.c.b16 %v994, %v988
      %v1565 = vpack.c.b16 %v995, %v989
      %v1566 = vpack.c.b16 %v1002, %v996
      %v1567 = vpack.c.b16 %v1003, %v997
      %v1568 = vpack.c.b16 %v1004, %v998
      %v1569 = vpack.c.b16 %v1005, %v999
      %v1570 = vpack.c.b16 %v1006, %v1000
      %v1571 = vpack.c.b16 %v1007, %v1001
      %v1572 = vpack.c.b16 %v1014, %v1008
      %v1573 = vpack.c.b16 %v1015, %v1009
      %v1574 = vpack.c.b16 %v1016, %v1010
      %v1575 = vpack.c.b16 %v1017, %v1011
      %v1576 = vpack.c.b16 %v1018, %v1012
      %v1577 = vpack.c.b16 %v1019, %v1013
      %v1578 = vpack.c.b16 %v1026, %v1020
      %v1579 = vpack.c.b16 %v1027, %v1021
      %v1580 = vpack.c.b16 %v1028, %v1022
      %v1581 = vpack.c.b16 %v1029, %v1023
      %v1582 = vpack.c.b16 %v1030, %v1024
      %v1583 = vpack.c.b16 %v1031, %v1025
      %v1584 = vpack.c.b16 %v1038, %v1032
      %v1585 = vpack.c.b16 %v1039, %v1033
      %v1586 = vpack.c.b16 %v1040, %v1034
      %v1587 = vpack.c.b16 %v1041, %v1035
      %v1588 = vpack.c.b16 %v1042, %v1036
      %v1589 = vpack.c.b16 %v1043, %v1037
      %v1590 = vpack.c.b16 %v1050, %v1044
      %v1591 = vpack.c.b16 %v1051, %v1045
      %v1592 = vpack.c.b16 %v1052, %v1046
      %v1593 = vpack.c.b16 %v1053, %v1047
      %v1594 = vpack.c.b16 %v1054, %v1048
      %v1595 = vpack.c.b16 %v1055, %v1049
      %v1596 = vpack.c.b16 %v1062, %v1056
      %v1597 = vpack.c.b16 %v1063, %v1057
      %v1598 = vpack.c.b16 %v1064, %v1058
      %v1599 = vpack.c.b16 %v1065, %v1059
      %v1600 = vpack.c.b16 %v1066, %v1060
      %v1601 = vpack.c.b16 %v1067, %v1061
      %v1602 = vpack.c.b16 %v1074, %v1068
      %v1603 = vpack.c.b16 %v1075, %v1069
      %v1604 = vpack.c.b16 %v1076, %v1070
      %v1605 = vpack.c.b16 %v1077, %v1071
      %v1606 = vpack.c.b16 %v1078, %v1072
      %v1607 = vpack.c.b16 %v1079, %v1073
      %v1608 = vpack.c.b16 %v1086, %v1080
      %v1609 = vpack.c.b16 %v1087, %v1081
      %v1610 = vpack.c.b16 %v1088, %v1082
      %v1611 = vpack.c.b16 %v1089, %v1083
      %v1612 = vpack.c.b16 %v1090, %v1084
      %v1613 = vpack.c.b16 %v1091, %v1085
      %v1614 = vpack.c.b16 %v1098, %v1092
      %v1615 = vpack.c.b16 %v1099, %v1093
      %v1616 = vpack.c.b16 %v1100, %v1094
      %v1617 = vpack.c.b16 %v1101, %v1095
      %v1618 = vpack.c.b16 %v1102, %v1096
      %v1619 = vpack.c.b16 %v1103, %v1097
      %v1620 = vpack.c.b16 %v1110, %v1104
      %v1621 = vpack.c.b16 %v1111, %v1105
      %v1622 = vpack.c.b16 %v1112, %v1106
      %v1623 = vpack.c.b16 %v1113, %v1107
      %v1624 = vpack.c.b16 %v1114, %v1108
      %v1625 = vpack.c.b16 %v1115, %v1109
      %v1626 = vpack.c.b16 %v1122, %v1116
      %v1627 = vpack.c.b16 %v1123, %v1117
      %v1628 = vpack.c.b16 %v1124, %v1118
      %v1629 = vpack.c.b16 %v1125, %v1119
      %v1630 = vpack.c.b16 %v1126, %v1120
      %v1631 = vpack.c.b16 %v1127, %v1121
      %v1632 = vpack.c.b16 %v1134, %v1128
      %v1633 = vpack.c.b16 %v1135, %v1129
      %v1634 = vpack.c.b16 %v1136, %v1130
      %v1635 = vpack.c.b16 %v1137, %v1131
      %v1636 = vpack.c.b16 %v1138, %v1132
      %v1637 = vpack.c.b16 %v1139, %v1133
      %v1638 = vpack.c.b16 %v1146, %v1140
      %v1639 = vpack.c.b16 %v1147, %v1141
      %v1640 = vpack.c.b16 %v1148, %v1142
      %v1641 = vpack.c.b16 %v1149, %v1143
      %v1642 = vpack.c.b16 %v1150, %v1144
      %v1643 = vpack.c.b16 %v1151, %v1145
      %v1644 = vpack.c.b16 %v1158, %v1152
      %v1645 = vpack.c.b16 %v1159, %v1153
      %v1646 = vpack.c.b16 %v1160, %v1154
      %v1647 = vpack.c.b16 %v1161, %v1155
      %v1648 = vpack.c.b16 %v1162, %v1156
      %v1649 = vpack.c.b16 %v1163, %v1157
      %v1650 = vpack.c.b16 %v1170, %v1164
      %v1651 = vpack.c.b16 %v1171, %v1165
      %v1652 = vpack.c.b16 %v1172, %v1166
      %v1653 = vpack.c.b16 %v1173, %v1167
      %v1654 = vpack.c.b16 %v1174, %v1168
      %v1655 = vpack.c.b16 %v1175, %v1169
      %v1656 = vpack.c.b16 %v1182, %v1176
      %v1657 = vpack.c.b16 %v1183, %v1177
      %v1658 = vpack.c.b16 %v1184, %v1178
      %v1659 = vpack.c.b16 %v1185, %v1179
      %v1660 = vpack.c.b16 %v1186, %v1180
      %v1661 = vpack.c.b16 %v1187, %v1181
      %v1662 = vpack.c.b16 %v1194, %v1188
      %v1663 = vpack.c.b16 %v1195, %v1189
      %v1664 = vpack.c.b16 %v1196, %v1190
      %v1665 = vpack.c.b16 %v1197, %v1191
      %v1666 = vpack.c.b16 %v1198, %v1192
      %v1667 = vpack.c.b16 %v1199, %v1193
      %v1668 = vpack.c.b16 %v1206, %v1200
      %v1669 = vpack.c.b16 %v1207, %v1201
      %v1670 = vpack.c.b16 %v1208, %v1202
      %v1671 = vpack.c.b16 %v1209, %v1203
      %v1672 = vpack.c.b16 %v1210, %v1204
      %v1673 = vpack.c.b16 %v1211, %v1205
      %v1674 = vpack.c.b16 %v1218, %v1212
      %v1675 = vpack.c.b16 %v1219, %v1213
      %v1676 = vpack.c.b16 %v1220, %v1214
      %v1677 = vpack.c.b16 %v1221, %v1215
      %v1678 = vpack.c.b16 %v1222, %v1216
      %v1679 = vpack.c.b16 %v1223, %v1217
      %v1680 = vpack.c.b16 %v1230, %v1224
      %v1681 = vpack.c.b16 %v1231, %v1225
      %v1682 = vpack.c.b16 %v1232, %v1226
      %v1683 = vpack.c.b16 %v1233, %v1227
      %v1684 = vpack.c.b16 %v1234, %v1228
      %v1685 = vpack.c.b16 %v1235, %v1229
      %v1686 = vpack.c.b16 %v1242, %v1236
      %v1687 = vpack.c.b16 %v1243, %v1237
      %v1688 = vpack.c.b16 %v1244, %v1238
      %v1689 = vpack.c.b16 %v1245, %v1239
      %v1690 = vpack.c.b16 %v1246, %v1240
      %v1691 = vpack.c.b16 %v1247, %v1241
      %v1692 = vpack.c.b16 %v1254, %v1248
      %v1693 = vpack.c.b16 %v1255, %v1249
      %v1694 = vpack.c.b16 %v1256, %v1250
      %v1695 = vpack.c.b16 %v1257, %v1251
      %v1696 = vpack.c.b16 %v1258, %v1252
      %v1697 = vpack.c.b16 %v1259, %v1253
      %v1698 = vpack.c.b16 %v1266, %v1260
      %v1699 = vpack.c.b16 %v1267, %v1261
      %v1700 = vpack.c.b16 %v1268, %v1262
      %v1701 = vpack.c.b16 %v1269, %v1263
      %v1702 = vpack.c.b16 %v1270, %v1264
      %v1703 = vpack.c.b16 %v1271, %v1265
      %v1704 = vpack.c.b16 %v1278, %v1272
      %v1705 = vpack.c.b16 %v1279, %v1273
      %v1706 = vpack.c.b16 %v1280, %v1274
      %v1707 = vpack.c.b16 %v1281, %v1275
      %v1708 = vpack.c.b16 %v1282, %v1276
      %v1709 = vpack.c.b16 %v1283, %v1277
      %v1710 = vpack.c.b16 %v1290, %v1284
      %v1711 = vpack.c.b16 %v1291, %v1285
      %v1712 = vpack.c.b16 %v1292, %v1286
      %v1713 = vpack.c.b16 %v1293, %v1287
      %v1714 = vpack.c.b16 %v1294, %v1288
      %v1715 = vpack.c.b16 %v1295, %v1289
      %v1716 = vpack.c.b16 %v1302, %v1296
      %v1717 = vpack.c.b16 %v1303, %v1297
      %v1718 = vpack.c.b16 %v1304, %v1298
      %v1719 = vpack.c.b16 %v1305, %v1299
      %v1720 = vpack.c.b16 %v1306, %v1300
      %v1721 = vpack.c.b16 %v1307, %v1301
      %v1722 = vpack.c.b16 %v1314, %v1308
      %v1723 = vpack.c.b16 %v1315, %v1309
      %v1724 = vpack.c.b16 %v1316, %v1310
      %v1725 = vpack.c.b16 %v1317, %v1311
      %v1726 = vpack.c.b16 %v1318, %v1312
      %v1727 = vpack.c.b16 %v1319, %v1313
      %v1728 = vpack.c.b16 %v1326, %v1320
      %v1729 = vpack.c.b16 %v1327, %v1321
      %v1730 = vpack.c.b16 %v1328, %v1322
      %v1731 = vpack.c.b16 %v1329, %v1323
      %v1732 = vpack.c.b16 %v1330, %v1324
      %v1733 = vpack.c.b16 %v1331, %v1325
      %v1734 = vpack.c.b16 %v1338, %v1332
      %v1735 = vpack.c.b16 %v1339, %v1333
      %v1736 = vpack.c.b16 %v1340, %v1334
      %v1737 = vpack.c.b16 %v1341, %v1335
      %v1738 = vpack.c.b16 %v1342, %v1336
      %v1739 = vpack.c.b16 %v1343, %v1337
      %v1740 = vpack.c.b16 %v1350, %v1344
      %v1741 = vpack.c.b16 %v1351, %v1345
      %v1742 = vpack.c.b16 %v1352, %v1346
      %v1743 = vpack.c.b16 %v1353, %v1347
      %v1744 = vpack.c.b16 %v1354, %v1348
      %v1745 = vpack.c.b16 %v1355, %v1349
      %v1746 = vpack.c.b16 %v1362, %v1356
      %v1747 = vpack.c.b16 %v1363, %v1357
      %v1748 = vpack.c.b16 %v1364, %v1358
      %v1749 = vpack.c.b16 %v1365, %v1359
      %v1750 = vpack.c.b16 %v1366, %v1360
      %v1751 = vpack.c.b16 %v1367, %v1361
      %v1752 = vpack.c.b16 %v1374, %v1368
      %v1753 = vpack.c.b16 %v1375, %v1369
      %v1754 = vpack.c.b16 %v1376, %v1370
      %v1755 = vpack.c.b16 %v1377, %v1371
      %v1756 = vpack.c.b16 %v1378, %v1372
      %v1757 = vpack.c.b16 %v1379, %v1373
      %v1758 = vpack.c.b16 %v1386, %v1380
      %v1759 = vpack.c.b16 %v1387, %v1381
      %v1760 = vpack.c.b16 %v1388, %v1382
      %v1761 = vpack.c.b16 %v1389, %v1383
      %v1762 = vpack.c.b16 %v1390, %v1384
      %v1763 = vpack.c.b16 %v1391, %v1385
      %v1764 = vpack.c.b16 %v1398, %v1392
      %v1765 = vpack.c.b16 %v1399, %v1393
      %v1766 = vpack.c.b16 %v1400, %v1394
      %v1767 = vpack.c.b16 %v1401, %v1395
      %v1768 = vpack.c.b16 %v1402, %v1396
      %v1769 = vpack.c.b16 %v1403, %v1397
      %v1770 = vpack.c.b16 %v1410, %v1404
      %v1771 = vpack.c.b16 %v1411, %v1405
      %v1772 = vpack.c.b16 %v1412, %v1406
      %v1773 = vpack.c.b16 %v1413, %v1407
      %v1774 = vpack.c.b16 %v1414, %v1408
      %v1775 = vpack.c.b16 %v1415, %v1409
      %v1776 = vpack.c.b16 %v1422, %v1416
      %v1777 = vpack.c.b16 %v1423, %v1417
      %v1778 = vpack.c.b16 %v1424, %v1418
      %v1779 = vpack.c.b16 %v1425, %v1419
      %v1780 = vpack.c.b16 %v1426, %v1420
      %v1781 = vpack.c.b16 %v1427, %v1421
      %v1782 = vpack.c.b16 %v1434, %v1428
      %v1783 = vpack.c.b16 %v1435, %v1429
      %v1784 = vpack.c.b16 %v1436, %v1430
      %v1785 = vpack.c.b16 %v1437, %v1431
      %v1786 = vpack.c.b16 %v1438, %v1432
      %v1787 = vpack.c.b16 %v1439, %v1433
      %v1788 = vpack.c.b16 %v1446, %v1440
      %v1789 = vpack.c.b16 %v1447, %v1441
      %v1790 = vpack.c.b16 %v1448, %v1442
      %v1791 = vpack.c.b16 %v1449, %v1443
      %v1792 = vpack.c.b16 %v1450, %v1444
      %v1793 = vpack.c.b16 %v1451, %v1445
      %v1794 = vpack.c.b16 %v1458, %v1452
      %v1795 = vpack.c.b16 %v1459, %v1453
      %v1796 = vpack.c.b16 %v1460, %v1454
      %v1797 = vpack.c.b16 %v1461, %v1455
      %v1798 = vpack.c.b16 %v1462, %v1456
      %v1799 = vpack.c.b16 %v1463, %v1457
      %v1800 = vpack.c.b16 %v1470, %v1464
      %v1801 = vpack.c.b16 %v1471, %v1465
      %v1802 = vpack.c.b16 %v1472, %v1466
      %v1803 = vpack.c.b16 %v1473, %v1467
      %v1804 = vpack.c.b16 %v1474, %v1468
      %v1805 = vpack.c.b16 %v1475, %v1469
      %v1806 = vpack.c.b16 %v1482, %v1476
      %v1807 = vpack.c.b16 %v1483, %v1477
      %v1808 = vpack.c.b16 %v1484, %v1478
      %v1809 = vpack.c.b16 %v1485, %v1479
      %v1810 = vpack.c.b16 %v1486, %v1480
      %v1811 = vpack.c.b16 %v1487, %v1481
      %v1812 = vpack.c.b16 %v1494, %v1488
      %v1813 = vpack.c.b16 %v1495, %v1489
      %v1814 = vpack.c.b16 %v1496, %v1490
      %v1815 = vpack.c.b16 %v1497, %v1491
      %v1816 = vpack.c.b16 %v1498, %v1492
      %v1817 = vpack.c.b16 %v1499, %v1493
      %v1818 = vpack.c.b16 %v1506, %v1500
      %v1819 = vpack.c.b16 %v1507, %v1501
      %v1820 = vpack.c.b16 %v1508, %v1502
      %v1821 = vpack.c.b16 %v1509, %v1503
      %v1822 = vpack.c.b16 %v1510, %v1504
      %v1823 = vpack.c.b16 %v1511, %v1505
      %v1824 = vpack.c.b16 %v1518, %v1512
      %v1825 = vpack.c.b16 %v1519, %v1513
      %v1826 = vpack.c.b16 %v1520, %v1514
      %v1827 = vpack.c.b16 %v1521, %v1515
      %v1828 = vpack.c.b16 %v1522, %v1516
      %v1829 = vpack.c.b16 %v1523, %v1517
      %v1830 = vpack.c.b16 %v1530, %v1524
      %v1831 = vpack.c.b16 %v1531, %v1525
      %v1832 = vpack.c.b16 %v1532, %v1526
      %v1833 = vpack.c.b16 %v1533, %v1527
      %v1834 = vpack.c.b16 %v1534, %v1528
      %v1835 = vpack.c.b16 %v1535, %v1529
      %v1836 = vpack.c.b16 %v1542, %v1536
      %v1837 = vpack.c.b16 %v1543, %v1537
      %v1838 = vpack.c.b16 %v1544, %v1538
      %v1839 = vpack.c.b16 %v1545, %v1539
      %v1840 = vpack.c.b16 %v1546, %v1540
      %v1841 = vpack.c.b16 %v1547, %v1541
      %v1842 = vpack.c.b16 %v1554, %v1548
      %v1843 = vpack.c.b16 %v1555, %v1549
      %v1844 = vpack.c.b16 %v1556, %v1550
      %v1845 = vpack.c.b16 %v1557, %v1551
      %v1846 = vpack.c.b16 %v1558, %v1552
      %v1847 = vpack.c.b16 %v1559, %v1553
      %2136 = vmatprep.subr.bf16.mxu0 %v1561
      %2137 = vmatpush1.bf16.msra.mxu0 %v1560
      %2138 = vmatprep.subr.bf16.mxu0 %v1567
      %2139 = vmatpush1.bf16.msra.mxu0 %v1566
      %2140 = vmatprep.subr.bf16.mxu0 %v1573
      %2141 = vmatpush1.bf16.msra.mxu0 %v1572
      %2142 = vmatprep.subr.bf16.mxu0 %v1579
      %2143 = vmatpush1.bf16.msra.mxu0 %v1578
      %2144 = vmatprep.subr.bf16.mxu0 %v1585
      %2145 = vmatpush1.bf16.msra.mxu0 %v1584
      %2146 = vmatprep.subr.bf16.mxu0 %v1591
      %2147 = vmatpush1.bf16.msra.mxu0 %v1590
      %2148 = vmatprep.subr.bf16.mxu0 %v1597
      %2149 = vmatpush1.bf16.msra.mxu0 %v1596
      %2150 = vmatprep.subr.bf16.mxu0 %v1603
      %2151 = vmatpush1.bf16.msra.mxu0 %v1602
      %2152 = vmatprep.subr.bf16.mxu0 %v1609
      %2153 = vmatpush1.bf16.msra.mxu0 %v1608
      %2154 = vmatprep.subr.bf16.mxu0 %v1615
      %2155 = vmatpush1.bf16.msra.mxu0 %v1614
      %2156 = vmatprep.subr.bf16.mxu0 %v1621
      %2157 = vmatpush1.bf16.msra.mxu0 %v1620
      %2158 = vmatprep.subr.bf16.mxu0 %v1627
      %2159 = vmatpush1.bf16.msra.mxu0 %v1626
      %2160 = vmatprep.subr.bf16.mxu0 %v1633
      %2161 = vmatpush1.bf16.msra.mxu0 %v1632
      %2162 = vmatprep.subr.bf16.mxu0 %v1639
      %2163 = vmatpush1.bf16.msra.mxu0 %v1638
      %2164 = vmatprep.subr.bf16.mxu0 %v1645
      %2165 = vmatpush1.bf16.msra.mxu0 %v1644
      %2166 = vmatprep.subr.bf16.mxu0 %v1651
      %2167 = vmatpush1.bf16.msra.mxu0 %v1650
      %2168 = vmatprep.mubr.bf16.mxu0 %v371
      %2169 = vmatmul.mubr.bf16.gmra.mrb[0].mxu0 %v370
      %v2170 = vpop.f32.mrb[0].mxu0
      %v2171 = vadd.f32 %v669, %v2170
      %v2172 = vpop.f32.mrb[0].mxu0
      %v2173 = vadd.f32 %v673, %v2172
      %v2174 = vpop.f32.mrb[0].mxu0
      %v2175 = vpop.f32.mrb[0].mxu0
      %2176 = vdwg.mxu0
      %2177 = vmatprep.subr.bf16.mxu0 %v1657
      %2178 = vmatpush1.bf16.msra.mxu0 %v1656
      %2179 = vmatprep.subr.bf16.mxu0 %v1663
      %2180 = vmatpush1.bf16.msra.mxu0 %v1662
      %2181 = vmatprep.subr.bf16.mxu0 %v1669
      %2182 = vmatpush1.bf16.msra.mxu0 %v1668
      %2183 = vmatprep.subr.bf16.mxu0 %v1675
      %2184 = vmatpush1.bf16.msra.mxu0 %v1674
      %2185 = vmatprep.subr.bf16.mxu0 %v1681
      %2186 = vmatpush1.bf16.msra.mxu0 %v1680
      %2187 = vmatprep.subr.bf16.mxu0 %v1687
      %2188 = vmatpush1.bf16.msra.mxu0 %v1686
      %2189 = vmatprep.subr.bf16.mxu0 %v1693
      %2190 = vmatpush1.bf16.msra.mxu0 %v1692
      %2191 = vmatprep.subr.bf16.mxu0 %v1699
      %2192 = vmatpush1.bf16.msra.mxu0 %v1698
      %2193 = vmatprep.subr.bf16.mxu0 %v1705
      %2194 = vmatpush1.bf16.msra.mxu0 %v1704
      %2195 = vmatprep.subr.bf16.mxu0 %v1711
      %2196 = vmatpush1.bf16.msra.mxu0 %v1710
      %2197 = vmatprep.subr.bf16.mxu0 %v1717
      %2198 = vmatpush1.bf16.msra.mxu0 %v1716
      %2199 = vmatprep.subr.bf16.mxu0 %v1723
      %2200 = vmatpush1.bf16.msra.mxu0 %v1722
      %2201 = vmatprep.subr.bf16.mxu0 %v1729
      %2202 = vmatpush1.bf16.msra.mxu0 %v1728
      %2203 = vmatprep.subr.bf16.mxu0 %v1735
      %2204 = vmatpush1.bf16.msra.mxu0 %v1734
      %2205 = vmatprep.subr.bf16.mxu0 %v1741
      %2206 = vmatpush1.bf16.msra.mxu0 %v1740
      %2207 = vmatprep.subr.bf16.mxu0 %v1747
      %2208 = vmatpush1.bf16.msra.mxu0 %v1746
      %2209 = vmatprep.mubr.bf16.mxu0 %v373
      %2210 = vmatmul.mubr.bf16.gmra.mrb[0].mxu0 %v372
      %v2211 = vpop.f32.mrb[0].mxu0
      %v2212 = vadd.f32 %v2171, %v2211
      %v2213 = vpop.f32.mrb[0].mxu0
      %v2214 = vadd.f32 %v2173, %v2213
      %v2215 = vpop.f32.mrb[0].mxu0
      %v2216 = vpop.f32.mrb[0].mxu0
      %2217 = vdwg.mxu0
      %2218 = vmatprep.subr.bf16.mxu0 %v1753
      %2219 = vmatpush1.bf16.msra.mxu0 %v1752
      %2220 = vmatprep.subr.bf16.mxu0 %v1759
      %2221 = vmatpush1.bf16.msra.mxu0 %v1758
      %2222 = vmatprep.subr.bf16.mxu0 %v1765
      %2223 = vmatpush1.bf16.msra.mxu0 %v1764
      %2224 = vmatprep.subr.bf16.mxu0 %v1771
      %2225 = vmatpush1.bf16.msra.mxu0 %v1770
      %2226 = vmatprep.subr.bf16.mxu0 %v1777
      %2227 = vmatpush1.bf16.msra.mxu0 %v1776
      %2228 = vmatprep.subr.bf16.mxu0 %v1783
      %2229 = vmatpush1.bf16.msra.mxu0 %v1782
      %2230 = vmatprep.subr.bf16.mxu0 %v1789
      %2231 = vmatpush1.bf16.msra.mxu0 %v1788
      %2232 = vmatprep.subr.bf16.mxu0 %v1795
      %2233 = vmatpush1.bf16.msra.mxu0 %v1794
      %2234 = vmatprep.subr.bf16.mxu0 %v1801
      %2235 = vmatpush1.bf16.msra.mxu0 %v1800
      %2236 = vmatprep.subr.bf16.mxu0 %v1807
      %2237 = vmatpush1.bf16.msra.mxu0 %v1806
      %2238 = vmatprep.subr.bf16.mxu0 %v1813
      %2239 = vmatpush1.bf16.msra.mxu0 %v1812
      %2240 = vmatprep.subr.bf16.mxu0 %v1819
      %2241 = vmatpush1.bf16.msra.mxu0 %v1818
      %2242 = vmatprep.subr.bf16.mxu0 %v1825
      %2243 = vmatpush1.bf16.msra.mxu0 %v1824
      %2244 = vmatprep.subr.bf16.mxu0 %v1831
      %2245 = vmatpush1.bf16.msra.mxu0 %v1830
      %2246 = vmatprep.subr.bf16.mxu0 %v1837
      %2247 = vmatpush1.bf16.msra.mxu0 %v1836
      %2248 = vmatprep.subr.bf16.mxu0 %v1843
      %2249 = vmatpush1.bf16.msra.mxu0 %v1842
      %2250 = vmatprep.mubr.bf16.mxu0 %v375
      %2251 = vmatmul.mubr.bf16.gmra.mrb[0].mxu0 %v374
      %v2252 = vpop.f32.mrb[0].mxu0
      %v2253 = vadd.f32 %v2212, %v2252
      %v2254 = vpop.f32.mrb[0].mxu0
      %v2255 = vadd.f32 %v2214, %v2254
      %v2256 = vpop.f32.mrb[0].mxu0
      %v2257 = vpop.f32.mrb[0].mxu0
      %2258 = vdwg.mxu0
      %2259 = vmatprep.subr.bf16.mxu0 %v1563
      %2260 = vmatpush1.bf16.msra.mxu0 %v1562
      %2261 = vmatprep.subr.bf16.mxu0 %v1569
      %2262 = vmatpush1.bf16.msra.mxu0 %v1568
      %2263 = vmatprep.subr.bf16.mxu0 %v1575
      %2264 = vmatpush1.bf16.msra.mxu0 %v1574
      %2265 = vmatprep.subr.bf16.mxu0 %v1581
      %2266 = vmatpush1.bf16.msra.mxu0 %v1580
      %2267 = vmatprep.subr.bf16.mxu0 %v1587
      %2268 = vmatpush1.bf16.msra.mxu0 %v1586
      %2269 = vmatprep.subr.bf16.mxu0 %v1593
      %2270 = vmatpush1.bf16.msra.mxu0 %v1592
      %2271 = vmatprep.subr.bf16.mxu0 %v1599
      %2272 = vmatpush1.bf16.msra.mxu0 %v1598
      %2273 = vmatprep.subr.bf16.mxu0 %v1605
      %2274 = vmatpush1.bf16.msra.mxu0 %v1604
      %2275 = vmatprep.subr.bf16.mxu0 %v1611
      %2276 = vmatpush1.bf16.msra.mxu0 %v1610
      %2277 = vmatprep.subr.bf16.mxu0 %v1617
      %2278 = vmatpush1.bf16.msra.mxu0 %v1616
      %2279 = vmatprep.subr.bf16.mxu0 %v1623
      %2280 = vmatpush1.bf16.msra.mxu0 %v1622
      %2281 = vmatprep.subr.bf16.mxu0 %v1629
      %2282 = vmatpush1.bf16.msra.mxu0 %v1628
      %2283 = vmatprep.subr.bf16.mxu0 %v1635
      %2284 = vmatpush1.bf16.msra.mxu0 %v1634
      %2285 = vmatprep.subr.bf16.mxu0 %v1641
      %2286 = vmatpush1.bf16.msra.mxu0 %v1640
      %2287 = vmatprep.subr.bf16.mxu0 %v1647
      %2288 = vmatpush1.bf16.msra.mxu0 %v1646
      %2289 = vmatprep.subr.bf16.mxu0 %v1653
      %2290 = vmatpush1.bf16.msra.mxu0 %v1652
      %2291 = vmatprep.mubr.bf16.mxu0 %v371
      %2292 = vmatmul.mubr.bf16.gmra.mrb[0].mxu0 %v370
      %v2293 = vpop.f32.mrb[0].mxu0
      %v2294 = vadd.f32 %v677, %v2293
      %v2295 = vpop.f32.mrb[0].mxu0
      %v2296 = vadd.f32 %v681, %v2295
      %v2297 = vpop.f32.mrb[0].mxu0
      %v2298 = vpop.f32.mrb[0].mxu0
      %2299 = vdwg.mxu0
      %2300 = vmatprep.subr.bf16.mxu0 %v1659
      %2301 = vmatpush1.bf16.msra.mxu0 %v1658
      %2302 = vmatprep.subr.bf16.mxu0 %v1665
      %2303 = vmatpush1.bf16.msra.mxu0 %v1664
      %2304 = vmatprep.subr.bf16.mxu0 %v1671
      %2305 = vmatpush1.bf16.msra.mxu0 %v1670
      %2306 = vmatprep.subr.bf16.mxu0 %v1677
      %2307 = vmatpush1.bf16.msra.mxu0 %v1676
      %2308 = vmatprep.subr.bf16.mxu0 %v1683
      %2309 = vmatpush1.bf16.msra.mxu0 %v1682
      %2310 = vmatprep.subr.bf16.mxu0 %v1689
      %2311 = vmatpush1.bf16.msra.mxu0 %v1688
      %2312 = vmatprep.subr.bf16.mxu0 %v1695
      %2313 = vmatpush1.bf16.msra.mxu0 %v1694
      %2314 = vmatprep.subr.bf16.mxu0 %v1701
      %2315 = vmatpush1.bf16.msra.mxu0 %v1700
      %2316 = vmatprep.subr.bf16.mxu0 %v1707
      %2317 = vmatpush1.bf16.msra.mxu0 %v1706
      %2318 = vmatprep.subr.bf16.mxu0 %v1713
      %2319 = vmatpush1.bf16.msra.mxu0 %v1712
      %2320 = vmatprep.subr.bf16.mxu0 %v1719
      %2321 = vmatpush1.bf16.msra.mxu0 %v1718
      %2322 = vmatprep.subr.bf16.mxu0 %v1725
      %2323 = vmatpush1.bf16.msra.mxu0 %v1724
      %2324 = vmatprep.subr.bf16.mxu0 %v1731
      %2325 = vmatpush1.bf16.msra.mxu0 %v1730
      %2326 = vmatprep.subr.bf16.mxu0 %v1737
      %2327 = vmatpush1.bf16.msra.mxu0 %v1736
      %2328 = vmatprep.subr.bf16.mxu0 %v1743
      %2329 = vmatpush1.bf16.msra.mxu0 %v1742
      %2330 = vmatprep.subr.bf16.mxu0 %v1749
      %2331 = vmatpush1.bf16.msra.mxu0 %v1748
      %2332 = vmatprep.mubr.bf16.mxu0 %v373
      %2333 = vmatmul.mubr.bf16.gmra.mrb[0].mxu0 %v372
      %v2334 = vpop.f32.mrb[0].mxu0
      %v2335 = vadd.f32 %v2294, %v2334
      %v2336 = vpop.f32.mrb[0].mxu0
      %v2337 = vadd.f32 %v2296, %v2336
      %v2338 = vpop.f32.mrb[0].mxu0
      %v2339 = vpop.f32.mrb[0].mxu0
      %2340 = vdwg.mxu0
      %2341 = vmatprep.subr.bf16.mxu0 %v1755
      %2342 = vmatpush1.bf16.msra.mxu0 %v1754
      %2343 = vmatprep.subr.bf16.mxu0 %v1761
      %2344 = vmatpush1.bf16.msra.mxu0 %v1760
      %2345 = vmatprep.subr.bf16.mxu0 %v1767
      %2346 = vmatpush1.bf16.msra.mxu0 %v1766
      %2347 = vmatprep.subr.bf16.mxu0 %v1773
      %2348 = vmatpush1.bf16.msra.mxu0 %v1772
      %2349 = vmatprep.subr.bf16.mxu0 %v1779
      %2350 = vmatpush1.bf16.msra.mxu0 %v1778
      %2351 = vmatprep.subr.bf16.mxu0 %v1785
      %2352 = vmatpush1.bf16.msra.mxu0 %v1784
      %2353 = vmatprep.subr.bf16.mxu0 %v1791
      %2354 = vmatpush1.bf16.msra.mxu0 %v1790
      %2355 = vmatprep.subr.bf16.mxu0 %v1797
      %2356 = vmatpush1.bf16.msra.mxu0 %v1796
      %2357 = vmatprep.subr.bf16.mxu0 %v1803
      %2358 = vmatpush1.bf16.msra.mxu0 %v1802
      %2359 = vmatprep.subr.bf16.mxu0 %v1809
      %2360 = vmatpush1.bf16.msra.mxu0 %v1808
      %2361 = vmatprep.subr.bf16.mxu0 %v1815
      %2362 = vmatpush1.bf16.msra.mxu0 %v1814
      %2363 = vmatprep.subr.bf16.mxu0 %v1821
      %2364 = vmatpush1.bf16.msra.mxu0 %v1820
      %2365 = vmatprep.subr.bf16.mxu0 %v1827
      %2366 = vmatpush1.bf16.msra.mxu0 %v1826
      %2367 = vmatprep.subr.bf16.mxu0 %v1833
      %2368 = vmatpush1.bf16.msra.mxu0 %v1832
      %2369 = vmatprep.subr.bf16.mxu0 %v1839
      %2370 = vmatpush1.bf16.msra.mxu0 %v1838
      %2371 = vmatprep.subr.bf16.mxu0 %v1845
      %2372 = vmatpush1.bf16.msra.mxu0 %v1844
      %2373 = vmatprep.mubr.bf16.mxu0 %v375
      %2374 = vmatmul.mubr.bf16.gmra.mrb[0].mxu0 %v374
      %v2375 = vpop.f32.mrb[0].mxu0
      %v2376 = vadd.f32 %v2335, %v2375
      %v2377 = vpop.f32.mrb[0].mxu0
      %v2378 = vadd.f32 %v2337, %v2377
      %v2379 = vpop.f32.mrb[0].mxu0
      %v2380 = vpop.f32.mrb[0].mxu0
      %2381 = vdwg.mxu0
      %2382 = vmatprep.subr.bf16.mxu0 %v1565
      %2383 = vmatpush1.bf16.msra.mxu0 %v1564
      %2384 = vmatprep.subr.bf16.mxu0 %v1571
      %2385 = vmatpush1.bf16.msra.mxu0 %v1570
      %2386 = vmatprep.subr.bf16.mxu0 %v1577
      %2387 = vmatpush1.bf16.msra.mxu0 %v1576
      %2388 = vmatprep.subr.bf16.mxu0 %v1583
      %2389 = vmatpush1.bf16.msra.mxu0 %v1582
      %2390 = vmatprep.subr.bf16.mxu0 %v1589
      %2391 = vmatpush1.bf16.msra.mxu0 %v1588
      %2392 = vmatprep.subr.bf16.mxu0 %v1595
      %2393 = vmatpush1.bf16.msra.mxu0 %v1594
      %2394 = vmatprep.subr.bf16.mxu0 %v1601
      %2395 = vmatpush1.bf16.msra.mxu0 %v1600
      %2396 = vmatprep.subr.bf16.mxu0 %v1607
      %2397 = vmatpush1.bf16.msra.mxu0 %v1606
      %2398 = vmatprep.subr.bf16.mxu0 %v1613
      %2399 = vmatpush1.bf16.msra.mxu0 %v1612
      %2400 = vmatprep.subr.bf16.mxu0 %v1619
      %2401 = vmatpush1.bf16.msra.mxu0 %v1618
      %2402 = vmatprep.subr.bf16.mxu0 %v1625
      %2403 = vmatpush1.bf16.msra.mxu0 %v1624
      %2404 = vmatprep.subr.bf16.mxu0 %v1631
      %2405 = vmatpush1.bf16.msra.mxu0 %v1630
      %2406 = vmatprep.subr.bf16.mxu0 %v1637
      %2407 = vmatpush1.bf16.msra.mxu0 %v1636
      %2408 = vmatprep.subr.bf16.mxu0 %v1643
      %2409 = vmatpush1.bf16.msra.mxu0 %v1642
      %2410 = vmatprep.subr.bf16.mxu0 %v1649
      %2411 = vmatpush1.bf16.msra.mxu0 %v1648
      %2412 = vmatprep.subr.bf16.mxu0 %v1655
      %2413 = vmatpush1.bf16.msra.mxu0 %v1654
      %2414 = vmatprep.mubr.bf16.mxu0 %v371
      %2415 = vmatmul.mubr.bf16.gmra.mrb[0].mxu0 %v370
      %v2416 = vpop.f32.mrb[0].mxu0
      %v2417 = vadd.f32 %v685, %v2416
      %v2418 = vpop.f32.mrb[0].mxu0
      %v2419 = vadd.f32 %v689, %v2418
      %v2420 = vpop.f32.mrb[0].mxu0
      %v2421 = vpop.f32.mrb[0].mxu0
      %2422 = vdwg.mxu0
      %2423 = vmatprep.subr.bf16.mxu0 %v1661
      %2424 = vmatpush1.bf16.msra.mxu0 %v1660
      %2425 = vmatprep.subr.bf16.mxu0 %v1667
      %2426 = vmatpush1.bf16.msra.mxu0 %v1666
      %2427 = vmatprep.subr.bf16.mxu0 %v1673
      %2428 = vmatpush1.bf16.msra.mxu0 %v1672
      %2429 = vmatprep.subr.bf16.mxu0 %v1679
      %2430 = vmatpush1.bf16.msra.mxu0 %v1678
      %2431 = vmatprep.subr.bf16.mxu0 %v1685
      %2432 = vmatpush1.bf16.msra.mxu0 %v1684
      %2433 = vmatprep.subr.bf16.mxu0 %v1691
      %2434 = vmatpush1.bf16.msra.mxu0 %v1690
      %2435 = vmatprep.subr.bf16.mxu0 %v1697
      %2436 = vmatpush1.bf16.msra.mxu0 %v1696
      %2437 = vmatprep.subr.bf16.mxu0 %v1703
      %2438 = vmatpush1.bf16.msra.mxu0 %v1702
      %2439 = vmatprep.subr.bf16.mxu0 %v1709
      %2440 = vmatpush1.bf16.msra.mxu0 %v1708
      %2441 = vmatprep.subr.bf16.mxu0 %v1715
      %2442 = vmatpush1.bf16.msra.mxu0 %v1714
      %2443 = vmatprep.subr.bf16.mxu0 %v1721
      %2444 = vmatpush1.bf16.msra.mxu0 %v1720
      %2445 = vmatprep.subr.bf16.mxu0 %v1727
      %2446 = vmatpush1.bf16.msra.mxu0 %v1726
      %2447 = vmatprep.subr.bf16.mxu0 %v1733
      %2448 = vmatpush1.bf16.msra.mxu0 %v1732
      %2449 = vmatprep.subr.bf16.mxu0 %v1739
      %2450 = vmatpush1.bf16.msra.mxu0 %v1738
      %2451 = vmatprep.subr.bf16.mxu0 %v1745
      %2452 = vmatpush1.bf16.msra.mxu0 %v1744
      %2453 = vmatprep.subr.bf16.mxu0 %v1751
      %2454 = vmatpush1.bf16.msra.mxu0 %v1750
      %2455 = vmatprep.mubr.bf16.mxu0 %v373
      %2456 = vmatmul.mubr.bf16.gmra.mrb[0].mxu0 %v372
      %v2457 = vpop.f32.mrb[0].mxu0
      %v2458 = vadd.f32 %v2417, %v2457
      %v2459 = vpop.f32.mrb[0].mxu0
      %v2460 = vadd.f32 %v2419, %v2459
      %v2461 = vpop.f32.mrb[0].mxu0
      %v2462 = vpop.f32.mrb[0].mxu0
      %2463 = vdwg.mxu0
      %2464 = vmatprep.subr.bf16.mxu0 %v1757
      %2465 = vmatpush1.bf16.msra.mxu0 %v1756
      %2466 = vmatprep.subr.bf16.mxu0 %v1763
      %2467 = vmatpush1.bf16.msra.mxu0 %v1762
      %2468 = vmatprep.subr.bf16.mxu0 %v1769
      %2469 = vmatpush1.bf16.msra.mxu0 %v1768
      %2470 = vmatprep.subr.bf16.mxu0 %v1775
      %2471 = vmatpush1.bf16.msra.mxu0 %v1774
      %2472 = vmatprep.subr.bf16.mxu0 %v1781
      %2473 = vmatpush1.bf16.msra.mxu0 %v1780
      %2474 = vmatprep.subr.bf16.mxu0 %v1787
      %2475 = vmatpush1.bf16.msra.mxu0 %v1786
      %2476 = vmatprep.subr.bf16.mxu0 %v1793
      %2477 = vmatpush1.bf16.msra.mxu0 %v1792
      %2478 = vmatprep.subr.bf16.mxu0 %v1799
      %2479 = vmatpush1.bf16.msra.mxu0 %v1798
      %2480 = vmatprep.subr.bf16.mxu0 %v1805
      %2481 = vmatpush1.bf16.msra.mxu0 %v1804
      %2482 = vmatprep.subr.bf16.mxu0 %v1811
      %2483 = vmatpush1.bf16.msra.mxu0 %v1810
      %2484 = vmatprep.subr.bf16.mxu0 %v1817
      %2485 = vmatpush1.bf16.msra.mxu0 %v1816
      %2486 = vmatprep.subr.bf16.mxu0 %v1823
      %2487 = vmatpush1.bf16.msra.mxu0 %v1822
      %2488 = vmatprep.subr.bf16.mxu0 %v1829
      %2489 = vmatpush1.bf16.msra.mxu0 %v1828
      %2490 = vmatprep.subr.bf16.mxu0 %v1835
      %2491 = vmatpush1.bf16.msra.mxu0 %v1834
      %2492 = vmatprep.subr.bf16.mxu0 %v1841
      %2493 = vmatpush1.bf16.msra.mxu0 %v1840
      %2494 = vmatprep.subr.bf16.mxu0 %v1847
      %2495 = vmatpush1.bf16.msra.mxu0 %v1846
      %2496 = vmatprep.mubr.bf16.mxu0 %v375
      %2497 = vmatmul.mubr.bf16.gmra.mrb[0].mxu0 %v374
      %v2498 = vpop.f32.mrb[0].mxu0
      %v2499 = vadd.f32 %v2458, %v2498
      %v2500 = vpop.f32.mrb[0].mxu0
      %v2501 = vadd.f32 %v2460, %v2500
      %v2502 = vpop.f32.mrb[0].mxu0
      %v2503 = vpop.f32.mrb[0].mxu0
      %2504 = vdwg.mxu0
      %v2505 = vtanh.pop %v2253
      %v2506 = vtanh.pop %v2255
      %v2507 = vtanh.pop %v2376
      %v2508 = vtanh.pop %v2378
      %v2509 = vtanh.pop %v2499
      %v2510 = vtanh.pop %v2501
      %v2511 = vld [vmem:[#allocation12] sm:$0xff]
      %v2512 = vld [vmem:[#allocation12 + $0x8] sm:$0xf]
      %v2515 = vcombine.high %v2511, %v2511
      %v2517 = vunpack.c.l.s4 1983009808
      %v2518 = vunpack.c.0.s8 %v2517
      %v2519 = vlaneseq
      %v2520 = vshrl.u32 %v2519, 7
      %v2521 = vsub.s32 %v2518, %v2520
      %v2522 = vrot.slane %v2511, %v2521
      %v2524 = vunpack.c.l.s4 1983009808
      %v2525 = vunpack.c.0.s8 %v2524
      %v2526 = vlaneseq
      %v2527 = vshrl.u32 %v2526, 7
      %v2528 = vsub.s32 %v2525, %v2527
      %v2529 = vrot.slane %v2515, %v2528
      %v2530 = vcombine.high %v2522, %v2522
      %v2531 = vcombine.high %v2529, %v2529
      %v2533 = vunpack.c.l.s4 1983009808
      %v2534 = vunpack.c.0.s8 %v2533
      %v2535 = vlaneseq
      %v2536 = vshrl.u32 %v2535, 7
      %v2537 = vsub.s32 %v2534, %v2536
      %v2538 = vrot.slane %v2512, %v2537
      %v2539 = vcombine.high %v2538, %v2538
      %v2546 = vmul.f32 %v2505, %v2522
      %v2547 = vmul.f32 %v2506, %v2530
      %v2548 = vmul.f32 %v2507, %v2529
      %v2549 = vmul.f32 %v2508, %v2531
      %v2550 = vmul.f32 %v2509, %v2538
      %v2551 = vmul.f32 %v2510, %v2539
      %v2552 = vpack.c.bf16 %v2546, %v2546
      %v2553 = vpack.c.bf16 %v2547, %v2547
      %v2554 = vpack.c.bf16 %v2548, %v2548
      %v2555 = vpack.c.bf16 %v2549, %v2549
      %v2556 = vpack.c.bf16 %v2550, %v2550
      %v2557 = vpack.c.bf16 %v2551, %v2551
      %v2558 = vld [vmem:[#allocation9] sm:$0xf]
      %v2559 = vld [vmem:[#allocation9 + $0x4] sm:$0xf]
      %v2560 = vld [vmem:[#allocation9 + $0x8] sm:$0xf]
      %v2561 = vld [vmem:[#allocation9 + $0xc] sm:$0xf]
      %v2562 = vld [vmem:[#allocation9 + $0x10] sm:$0xf]
      %v2563 = vld [vmem:[#allocation9 + $0x14] sm:$0xf]
      %v2564 = vld [vmem:[#allocation9 + $0x18] sm:$0xf]
      %v2565 = vld [vmem:[#allocation9 + $0x1c] sm:$0xf]
      %v2566 = vld [vmem:[#allocation9 + $0x20] sm:$0xf]
      %v2567 = vld [vmem:[#allocation9 + $0x24] sm:$0xf]
      %v2568 = vld [vmem:[#allocation9 + $0x28] sm:$0xf]
      %v2569 = vld [vmem:[#allocation9 + $0x2c] sm:$0xf]
      %v2570 = vld [vmem:[#allocation9 + $0x30] sm:$0xf]
      %v2571 = vld [vmem:[#allocation9 + $0x34] sm:$0xf]
      %v2572 = vld [vmem:[#allocation9 + $0x38] sm:$0xf]
      %v2573 = vld [vmem:[#allocation9 + $0x3c] sm:$0xf]
      %v2574 = vld [vmem:[#allocation9 + $0x40] sm:$0xf]
      %v2575 = vld [vmem:[#allocation9 + $0x44] sm:$0xf]
      %v2576 = vld [vmem:[#allocation9 + $0x48] sm:$0xf]
      %v2577 = vld [vmem:[#allocation9 + $0x4c] sm:$0xf]
      %v2578 = vld [vmem:[#allocation9 + $0x50] sm:$0xf]
      %v2579 = vld [vmem:[#allocation9 + $0x54] sm:$0xf]
      %v2580 = vld [vmem:[#allocation9 + $0x58] sm:$0xf]
      %v2581 = vld [vmem:[#allocation9 + $0x5c] sm:$0xf]
      %v2582 = vld [vmem:[#allocation9 + $0x60] sm:$0xf]
      %v2583 = vld [vmem:[#allocation9 + $0x64] sm:$0xf]
      %v2584 = vld [vmem:[#allocation9 + $0x68] sm:$0xf]
      %v2585 = vld [vmem:[#allocation9 + $0x6c] sm:$0xf]
      %v2586 = vld [vmem:[#allocation9 + $0x70] sm:$0xf]
      %v2587 = vld [vmem:[#allocation9 + $0x74] sm:$0xf]
      %v2588 = vld [vmem:[#allocation9 + $0x78] sm:$0xf]
      %v2589 = vld [vmem:[#allocation9 + $0x7c] sm:$0xf]
      %v2590 = vld [vmem:[#allocation9 + $0x80] sm:$0xf]
      %v2591 = vld [vmem:[#allocation9 + $0x84] sm:$0xf]
      %v2592 = vld [vmem:[#allocation9 + $0x88] sm:$0xf]
      %v2593 = vld [vmem:[#allocation9 + $0x8c] sm:$0xf]
      %v2594 = vld [vmem:[#allocation9 + $0x90] sm:$0xf]
      %v2595 = vld [vmem:[#allocation9 + $0x94] sm:$0xf]
      %v2596 = vld [vmem:[#allocation9 + $0x98] sm:$0xf]
      %v2597 = vld [vmem:[#allocation9 + $0x9c] sm:$0xf]
      %v2598 = vld [vmem:[#allocation9 + $0xa0] sm:$0xf]
      %v2599 = vld [vmem:[#allocation9 + $0xa4] sm:$0xf]
      %v2600 = vld [vmem:[#allocation9 + $0xa8] sm:$0xf]
      %v2601 = vld [vmem:[#allocation9 + $0xac] sm:$0xf]
      %v2602 = vld [vmem:[#allocation9 + $0xb0] sm:$0xf]
      %v2603 = vld [vmem:[#allocation9 + $0xb4] sm:$0xf]
      %v2604 = vld [vmem:[#allocation9 + $0xb8] sm:$0xf]
      %v2605 = vld [vmem:[#allocation9 + $0xbc] sm:$0xf]
      %v2606 = vld [vmem:[#allocation9 + $0xc0] sm:$0xf]
      %v2607 = vld [vmem:[#allocation9 + $0xc4] sm:$0xf]
      %v2608 = vld [vmem:[#allocation9 + $0xc8] sm:$0xf]
      %v2609 = vld [vmem:[#allocation9 + $0xcc] sm:$0xf]
      %v2610 = vld [vmem:[#allocation9 + $0xd0] sm:$0xf]
      %v2611 = vld [vmem:[#allocation9 + $0xd4] sm:$0xf]
      %v2612 = vld [vmem:[#allocation9 + $0xd8] sm:$0xf]
      %v2613 = vld [vmem:[#allocation9 + $0xdc] sm:$0xf]
      %v2614 = vld [vmem:[#allocation9 + $0xe0] sm:$0xf]
      %v2615 = vld [vmem:[#allocation9 + $0xe4] sm:$0xf]
      %v2616 = vld [vmem:[#allocation9 + $0xe8] sm:$0xf]
      %v2617 = vld [vmem:[#allocation9 + $0xec] sm:$0xf]
      %v2618 = vld [vmem:[#allocation9 + $0xf0] sm:$0xf]
      %v2619 = vld [vmem:[#allocation9 + $0xf4] sm:$0xf]
      %v2620 = vld [vmem:[#allocation9 + $0xf8] sm:$0xf]
      %v2621 = vld [vmem:[#allocation9 + $0xfc] sm:$0xf]
      %v2622 = vld [vmem:[#allocation9 + $0x100] sm:$0xf]
      %v2623 = vld [vmem:[#allocation9 + $0x104] sm:$0xf]
      %v2624 = vld [vmem:[#allocation9 + $0x108] sm:$0xf]
      %v2625 = vld [vmem:[#allocation9 + $0x10c] sm:$0xf]
      %v2626 = vld [vmem:[#allocation9 + $0x110] sm:$0xf]
      %v2627 = vld [vmem:[#allocation9 + $0x114] sm:$0xf]
      %v2628 = vld [vmem:[#allocation9 + $0x118] sm:$0xf]
      %v2629 = vld [vmem:[#allocation9 + $0x11c] sm:$0xf]
      %v2630 = vld [vmem:[#allocation9 + $0x120] sm:$0xf]
      %v2631 = vld [vmem:[#allocation9 + $0x124] sm:$0xf]
      %v2632 = vld [vmem:[#allocation9 + $0x128] sm:$0xf]
      %v2633 = vld [vmem:[#allocation9 + $0x12c] sm:$0xf]
      %v2634 = vld [vmem:[#allocation9 + $0x130] sm:$0xf]
      %v2635 = vld [vmem:[#allocation9 + $0x134] sm:$0xf]
      %v2636 = vld [vmem:[#allocation9 + $0x138] sm:$0xf]
      %v2637 = vld [vmem:[#allocation9 + $0x13c] sm:$0xf]
      %v2638 = vld [vmem:[#allocation9 + $0x140] sm:$0xf]
      %v2639 = vld [vmem:[#allocation9 + $0x144] sm:$0xf]
      %v2640 = vld [vmem:[#allocation9 + $0x148] sm:$0xf]
      %v2641 = vld [vmem:[#allocation9 + $0x14c] sm:$0xf]
      %v2642 = vld [vmem:[#allocation9 + $0x150] sm:$0xf]
      %v2643 = vld [vmem:[#allocation9 + $0x154] sm:$0xf]
      %v2644 = vld [vmem:[#allocation9 + $0x158] sm:$0xf]
      %v2645 = vld [vmem:[#allocation9 + $0x15c] sm:$0xf]
      %v2646 = vld [vmem:[#allocation9 + $0x160] sm:$0xf]
      %v2647 = vld [vmem:[#allocation9 + $0x164] sm:$0xf]
      %v2648 = vld [vmem:[#allocation9 + $0x168] sm:$0xf]
      %v2649 = vld [vmem:[#allocation9 + $0x16c] sm:$0xf]
      %v2650 = vld [vmem:[#allocation9 + $0x170] sm:$0xf]
      %v2651 = vld [vmem:[#allocation9 + $0x174] sm:$0xf]
      %v2652 = vld [vmem:[#allocation9 + $0x178] sm:$0xf]
      %v2653 = vld [vmem:[#allocation9 + $0x17c] sm:$0xf]
      %v2654 = vld [vmem:[#allocation11] sm:$0x1]
      %v2656 = vlaneseq
      %v2657 = vshrl.u32 %v2656, 7
      %v2658 = vsub.s32 0, %v2657
      %v2659 = vrot.slane %v2654, %v2658
      %v2757 = vunpack.c.l.b16 %v2558
      %v2758 = vunpack.c.l.b16 %v2559
      %v2759 = vunpack.c.l.b16 %v2560
      %v2760 = vunpack.c.l.b16 %v2561
      %v2761 = vunpack.c.l.b16 %v2562
      %v2762 = vunpack.c.l.b16 %v2563
      %v2763 = vunpack.c.l.b16 %v2564
      %v2764 = vunpack.c.l.b16 %v2565
      %v2765 = vunpack.c.l.b16 %v2566
      %v2766 = vunpack.c.l.b16 %v2567
      %v2767 = vunpack.c.l.b16 %v2568
      %v2768 = vunpack.c.l.b16 %v2569
      %v2769 = vunpack.c.l.b16 %v2570
      %v2770 = vunpack.c.l.b16 %v2571
      %v2771 = vunpack.c.l.b16 %v2572
      %v2772 = vunpack.c.l.b16 %v2573
      %v2773 = vunpack.c.l.b16 %v2574
      %v2774 = vunpack.c.l.b16 %v2575
      %v2775 = vunpack.c.l.b16 %v2576
      %v2776 = vunpack.c.l.b16 %v2577
      %v2777 = vunpack.c.l.b16 %v2578
      %v2778 = vunpack.c.l.b16 %v2579
      %v2779 = vunpack.c.l.b16 %v2580
      %v2780 = vunpack.c.l.b16 %v2581
      %v2781 = vunpack.c.l.b16 %v2582
      %v2782 = vunpack.c.l.b16 %v2583
      %v2783 = vunpack.c.l.b16 %v2584
      %v2784 = vunpack.c.l.b16 %v2585
      %v2785 = vunpack.c.l.b16 %v2586
      %v2786 = vunpack.c.l.b16 %v2587
      %v2787 = vunpack.c.l.b16 %v2588
      %v2788 = vunpack.c.l.b16 %v2589
      %v2789 = vunpack.c.l.b16 %v2590
      %v2790 = vunpack.c.l.b16 %v2591
      %v2791 = vunpack.c.l.b16 %v2592
      %v2792 = vunpack.c.l.b16 %v2593
      %v2793 = vunpack.c.l.b16 %v2594
      %v2794 = vunpack.c.l.b16 %v2595
      %v2795 = vunpack.c.l.b16 %v2596
      %v2796 = vunpack.c.l.b16 %v2597
      %v2797 = vunpack.c.l.b16 %v2598
      %v2798 = vunpack.c.l.b16 %v2599
      %v2799 = vunpack.c.l.b16 %v2600
      %v2800 = vunpack.c.l.b16 %v2601
      %v2801 = vunpack.c.l.b16 %v2602
      %v2802 = vunpack.c.l.b16 %v2603
      %v2803 = vunpack.c.l.b16 %v2604
      %v2804 = vunpack.c.l.b16 %v2605
      %v2805 = vunpack.c.l.b16 %v2606
      %v2806 = vunpack.c.l.b16 %v2607
      %v2807 = vunpack.c.l.b16 %v2608
      %v2808 = vunpack.c.l.b16 %v2609
      %v2809 = vunpack.c.l.b16 %v2610
      %v2810 = vunpack.c.l.b16 %v2611
      %v2811 = vunpack.c.l.b16 %v2612
      %v2812 = vunpack.c.l.b16 %v2613
      %v2813 = vunpack.c.l.b16 %v2614
      %v2814 = vunpack.c.l.b16 %v2615
      %v2815 = vunpack.c.l.b16 %v2616
      %v2816 = vunpack.c.l.b16 %v2617
      %v2817 = vunpack.c.l.b16 %v2618
      %v2818 = vunpack.c.l.b16 %v2619
      %v2819 = vunpack.c.l.b16 %v2620
      %v2820 = vunpack.c.l.b16 %v2621
      %v2821 = vunpack.c.l.b16 %v2622
      %v2822 = vunpack.c.l.b16 %v2623
      %v2823 = vunpack.c.l.b16 %v2624
      %v2824 = vunpack.c.l.b16 %v2625
      %v2825 = vunpack.c.l.b16 %v2626
      %v2826 = vunpack.c.l.b16 %v2627
      %v2827 = vunpack.c.l.b16 %v2628
      %v2828 = vunpack.c.l.b16 %v2629
      %v2829 = vunpack.c.l.b16 %v2630
      %v2830 = vunpack.c.l.b16 %v2631
      %v2831 = vunpack.c.l.b16 %v2632
      %v2832 = vunpack.c.l.b16 %v2633
      %v2833 = vunpack.c.l.b16 %v2634
      %v2834 = vunpack.c.l.b16 %v2635
      %v2835 = vunpack.c.l.b16 %v2636
      %v2836 = vunpack.c.l.b16 %v2637
      %v2837 = vunpack.c.l.b16 %v2638
      %v2838 = vunpack.c.l.b16 %v2639
      %v2839 = vunpack.c.l.b16 %v2640
      %v2840 = vunpack.c.l.b16 %v2641
      %v2841 = vunpack.c.l.b16 %v2642
      %v2842 = vunpack.c.l.b16 %v2643
      %v2843 = vunpack.c.l.b16 %v2644
      %v2844 = vunpack.c.l.b16 %v2645
      %v2845 = vunpack.c.l.b16 %v2646
      %v2846 = vunpack.c.l.b16 %v2647
      %v2847 = vunpack.c.l.b16 %v2648
      %v2848 = vunpack.c.l.b16 %v2649
      %v2849 = vunpack.c.l.b16 %v2650
      %v2850 = vunpack.c.l.b16 %v2651
      %v2851 = vunpack.c.l.b16 %v2652
      %v2852 = vunpack.c.l.b16 %v2653
      %v2853 = vpack.c.b16 %v2758, %v2757
      %v2854 = vpack.c.b16 %v2760, %v2759
      %v2855 = vpack.c.b16 %v2762, %v2761
      %v2856 = vpack.c.b16 %v2764, %v2763
      %v2857 = vpack.c.b16 %v2766, %v2765
      %v2858 = vpack.c.b16 %v2768, %v2767
      %v2859 = vpack.c.b16 %v2770, %v2769
      %v2860 = vpack.c.b16 %v2772, %v2771
      %v2861 = vpack.c.b16 %v2774, %v2773
      %v2862 = vpack.c.b16 %v2776, %v2775
      %v2863 = vpack.c.b16 %v2778, %v2777
      %v2864 = vpack.c.b16 %v2780, %v2779
      %v2865 = vpack.c.b16 %v2782, %v2781
      %v2866 = vpack.c.b16 %v2784, %v2783
      %v2867 = vpack.c.b16 %v2786, %v2785
      %v2868 = vpack.c.b16 %v2788, %v2787
      %v2869 = vpack.c.b16 %v2790, %v2789
      %v2870 = vpack.c.b16 %v2792, %v2791
      %v2871 = vpack.c.b16 %v2794, %v2793
      %v2872 = vpack.c.b16 %v2796, %v2795
      %v2873 = vpack.c.b16 %v2798, %v2797
      %v2874 = vpack.c.b16 %v2800, %v2799
      %v2875 = vpack.c.b16 %v2802, %v2801
      %v2876 = vpack.c.b16 %v2804, %v2803
      %v2877 = vpack.c.b16 %v2806, %v2805
      %v2878 = vpack.c.b16 %v2808, %v2807
      %v2879 = vpack.c.b16 %v2810, %v2809
      %v2880 = vpack.c.b16 %v2812, %v2811
      %v2881 = vpack.c.b16 %v2814, %v2813
      %v2882 = vpack.c.b16 %v2816, %v2815
      %v2883 = vpack.c.b16 %v2818, %v2817
      %v2884 = vpack.c.b16 %v2820, %v2819
      %v2885 = vpack.c.b16 %v2822, %v2821
      %v2886 = vpack.c.b16 %v2824, %v2823
      %v2887 = vpack.c.b16 %v2826, %v2825
      %v2888 = vpack.c.b16 %v2828, %v2827
      %v2889 = vpack.c.b16 %v2830, %v2829
      %v2890 = vpack.c.b16 %v2832, %v2831
      %v2891 = vpack.c.b16 %v2834, %v2833
      %v2892 = vpack.c.b16 %v2836, %v2835
      %v2893 = vpack.c.b16 %v2838, %v2837
      %v2894 = vpack.c.b16 %v2840, %v2839
      %v2895 = vpack.c.b16 %v2842, %v2841
      %v2896 = vpack.c.b16 %v2844, %v2843
      %v2897 = vpack.c.b16 %v2846, %v2845
      %v2898 = vpack.c.b16 %v2848, %v2847
      %v2899 = vpack.c.b16 %v2850, %v2849
      %v2900 = vpack.c.b16 %v2852, %v2851
      %2949 = vmatprep.subr.bf16.mxu0 0
      %2950 = vmatpush1.bf16.msra.mxu0 %v2853
      %2951 = vmatprep.subr.bf16.mxu0 0
      %2952 = vmatpush1.bf16.msra.mxu0 %v2854
      %2953 = vmatprep.subr.bf16.mxu0 0
      %2954 = vmatpush1.bf16.msra.mxu0 %v2855
      %2955 = vmatprep.subr.bf16.mxu0 0
      %2956 = vmatpush1.bf16.msra.mxu0 %v2856
      %2957 = vmatprep.subr.bf16.mxu0 0
      %2958 = vmatpush1.bf16.msra.mxu0 %v2857
      %2959 = vmatprep.subr.bf16.mxu0 0
      %2960 = vmatpush1.bf16.msra.mxu0 %v2858
      %2961 = vmatprep.subr.bf16.mxu0 0
      %2962 = vmatpush1.bf16.msra.mxu0 %v2859
      %2963 = vmatprep.subr.bf16.mxu0 0
      %2964 = vmatpush1.bf16.msra.mxu0 %v2860
      %2965 = vmatprep.subr.bf16.mxu0 0
      %2966 = vmatpush1.bf16.msra.mxu0 %v2861
      %2967 = vmatprep.subr.bf16.mxu0 0
      %2968 = vmatpush1.bf16.msra.mxu0 %v2862
      %2969 = vmatprep.subr.bf16.mxu0 0
      %2970 = vmatpush1.bf16.msra.mxu0 %v2863
      %2971 = vmatprep.subr.bf16.mxu0 0
      %2972 = vmatpush1.bf16.msra.mxu0 %v2864
      %2973 = vmatprep.subr.bf16.mxu0 0
      %2974 = vmatpush1.bf16.msra.mxu0 %v2865
      %2975 = vmatprep.subr.bf16.mxu0 0
      %2976 = vmatpush1.bf16.msra.mxu0 %v2866
      %2977 = vmatprep.subr.bf16.mxu0 0
      %2978 = vmatpush1.bf16.msra.mxu0 %v2867
      %2979 = vmatprep.subr.bf16.mxu0 0
      %2980 = vmatpush1.bf16.msra.mxu0 %v2868
      %2981 = vmatprep.mubr.bf16.mxu0 %v2553
      %2982 = vmatmul.mubr.bf16.gmra.mrb[0].mxu0 %v2552
      %v2983 = vpop.f32.mrb[0].mxu0
      %v2984 = vadd.f32 %v2659, %v2983
      %v2985 = vpop.f32.mrb[0].mxu0
      %v2986 = vpop.f32.mrb[0].mxu0
      %v2987 = vpop.f32.mrb[0].mxu0
      %2988 = vdwg.mxu0
      %2989 = vmatprep.subr.bf16.mxu0 0
      %2990 = vmatpush1.bf16.msra.mxu0 %v2869
      %2991 = vmatprep.subr.bf16.mxu0 0
      %2992 = vmatpush1.bf16.msra.mxu0 %v2870
      %2993 = vmatprep.subr.bf16.mxu0 0
      %2994 = vmatpush1.bf16.msra.mxu0 %v2871
      %2995 = vmatprep.subr.bf16.mxu0 0
      %2996 = vmatpush1.bf16.msra.mxu0 %v2872
      %2997 = vmatprep.subr.bf16.mxu0 0
      %2998 = vmatpush1.bf16.msra.mxu0 %v2873
      %2999 = vmatprep.subr.bf16.mxu0 0
      %3000 = vmatpush1.bf16.msra.mxu0 %v2874
      %3001 = vmatprep.subr.bf16.mxu0 0
      %3002 = vmatpush1.bf16.msra.mxu0 %v2875
      %3003 = vmatprep.subr.bf16.mxu0 0
      %3004 = vmatpush1.bf16.msra.mxu0 %v2876
      %3005 = vmatprep.subr.bf16.mxu0 0
      %3006 = vmatpush1.bf16.msra.mxu0 %v2877
      %3007 = vmatprep.subr.bf16.mxu0 0
      %3008 = vmatpush1.bf16.msra.mxu0 %v2878
      %3009 = vmatprep.subr.bf16.mxu0 0
      %3010 = vmatpush1.bf16.msra.mxu0 %v2879
      %3011 = vmatprep.subr.bf16.mxu0 0
      %3012 = vmatpush1.bf16.msra.mxu0 %v2880
      %3013 = vmatprep.subr.bf16.mxu0 0
      %3014 = vmatpush1.bf16.msra.mxu0 %v2881
      %3015 = vmatprep.subr.bf16.mxu0 0
      %3016 = vmatpush1.bf16.msra.mxu0 %v2882
      %3017 = vmatprep.subr.bf16.mxu0 0
      %3018 = vmatpush1.bf16.msra.mxu0 %v2883
      %3019 = vmatprep.subr.bf16.mxu0 0
      %3020 = vmatpush1.bf16.msra.mxu0 %v2884
      %3021 = vmatprep.mubr.bf16.mxu0 %v2555
      %3022 = vmatmul.mubr.bf16.gmra.mrb[0].mxu0 %v2554
      %v3023 = vpop.f32.mrb[0].mxu0
      %v3024 = vadd.f32 %v2984, %v3023
      %v3025 = vpop.f32.mrb[0].mxu0
      %v3026 = vpop.f32.mrb[0].mxu0
      %v3027 = vpop.f32.mrb[0].mxu0
      %3028 = vdwg.mxu0
      %3029 = vmatprep.subr.bf16.mxu0 0
      %3030 = vmatpush1.bf16.msra.mxu0 %v2885
      %3031 = vmatprep.subr.bf16.mxu0 0
      %3032 = vmatpush1.bf16.msra.mxu0 %v2886
      %3033 = vmatprep.subr.bf16.mxu0 0
      %3034 = vmatpush1.bf16.msra.mxu0 %v2887
      %3035 = vmatprep.subr.bf16.mxu0 0
      %3036 = vmatpush1.bf16.msra.mxu0 %v2888
      %3037 = vmatprep.subr.bf16.mxu0 0
      %3038 = vmatpush1.bf16.msra.mxu0 %v2889
      %3039 = vmatprep.subr.bf16.mxu0 0
      %3040 = vmatpush1.bf16.msra.mxu0 %v2890
      %3041 = vmatprep.subr.bf16.mxu0 0
      %3042 = vmatpush1.bf16.msra.mxu0 %v2891
      %3043 = vmatprep.subr.bf16.mxu0 0
      %3044 = vmatpush1.bf16.msra.mxu0 %v2892
      %3045 = vmatprep.subr.bf16.mxu0 0
      %3046 = vmatpush1.bf16.msra.mxu0 %v2893
      %3047 = vmatprep.subr.bf16.mxu0 0
      %3048 = vmatpush1.bf16.msra.mxu0 %v2894
      %3049 = vmatprep.subr.bf16.mxu0 0
      %3050 = vmatpush1.bf16.msra.mxu0 %v2895
      %3051 = vmatprep.subr.bf16.mxu0 0
      %3052 = vmatpush1.bf16.msra.mxu0 %v2896
      %3053 = vmatprep.subr.bf16.mxu0 0
      %3054 = vmatpush1.bf16.msra.mxu0 %v2897
      %3055 = vmatprep.subr.bf16.mxu0 0
      %3056 = vmatpush1.bf16.msra.mxu0 %v2898
      %3057 = vmatprep.subr.bf16.mxu0 0
      %3058 = vmatpush1.bf16.msra.mxu0 %v2899
      %3059 = vmatprep.subr.bf16.mxu0 0
      %3060 = vmatpush1.bf16.msra.mxu0 %v2900
      %3061 = vmatprep.mubr.bf16.mxu0 %v2557
      %3062 = vmatmul.mubr.bf16.gmra.mrb[0].mxu0 %v2556
      %v3063 = vpop.f32.mrb[0].mxu0
      %v3064 = vadd.f32 %v3024, %v3063
      %v3065 = vpop.f32.mrb[0].mxu0
      %v3066 = vpop.f32.mrb[0].mxu0
      %v3067 = vpop.f32.mrb[0].mxu0
      %3068 = vdwg.mxu0
      %3069 = vst [vmem:[#allocation14] sm:$0x3] %v3064
    $region65: #{tpu_custom_call.1} parent=1 // pred_fallthru
      _
    // Predicated region
    $region66: #{tpu_custom_call.1} parent=1 // pred_check
      _
    $region67: #{tpu_custom_call.1} parent=1 // pred_check_branch
      %3071 = sbr.rel (0) target = $region69
    $region68: #{tpu_custom_call.1} parent=1 // pred_region
      %s3073 = ssub.s32 32, 32
      %3074 = vsyncadd [#allocation5], %s3073
      %s3076 = sshll.u32 [#allocation14], 4
      %s3077 = int_to_ptr.vmem [resolvable:$true] %s3076
      %3079 = dma.vmem_to_hbm [thread:$0]  %s3077, 32, %s8, [#allocation5]
    $region69: #{tpu_custom_call.1} parent=1 // pred_fallthru
      _
    // Predicated region
    $region70: #{tpu_custom_call.1} parent=1 // pred_check
      _
    $region71: #{tpu_custom_call.1} parent=1 // pred_check_branch
      %3081 = sbr.rel (0) target = $region73
    $region72: #{tpu_custom_call.1} parent=1 // pred_region
      %3082 = dma.done [#allocation5], 32
    $region73: #{tpu_custom_call.1} parent=1 // pred_fallthru
      _
    %3083 = vsyncpa [#allocation4], 1
    %3084 = vsyncpa [#allocation7], 1
    %3085 = vsyncpa [#allocation10], 1
    %3086 = vsyncpa [#allocation13], 1
    %3087 = vsyncpa [#allocation5], 1

</llo_original>
